<compile_context>
chip_gen: v5e
topology: v5e:2x2
jax: 0.10.0
libtpu: 0.0.40
codegen_flags: <defaults>
</compile_context>

<pallas_src>
import functools
import math

import jax
import jax.numpy as jnp
from jax.experimental import pallas as pl
from jax.experimental.pallas import tpu as pltpu

# ----------------------------- config (scaled-down DistilBERT) ----------------
HIDDEN = 128          # stands in for BERT_HIDDEN_DIM = 768
N_LAYERS = 2
N_HEADS = 2
HEAD_DIM = HIDDEN // N_HEADS
FFN_DIM = 256
VOCAB = 64
MAX_POS = 16
NUM_CATEGORIES = 4
LANE = 128            # lane-dense padded classifier width
LN_EPS = 1e-12
DTYPE = jnp.float32
WDTYPE = jnp.bfloat16   # MXU operand dtype (accumulation stays f32)
GELU_APPROX = True      # tanh GELU -> EUP slot; set False for exact-DistilBERT parity


# ----------------------------- in-kernel helpers -------------------------------
def _mm(x, w):
    """MXU matmul: bf16 operands, f32 accumulation."""
    return jnp.dot(x.astype(WDTYPE), w.astype(WDTYPE),
                   preferred_element_type=jnp.float32)


def _layernorm(x, g, b):
    mu = jnp.mean(x, axis=-1, keepdims=True)
    var = jnp.mean((x - mu) ** 2, axis=-1, keepdims=True)
    return (x - mu) * jax.lax.rsqrt(var + LN_EPS) * g + b


# ----------------------------- fused forward kernel ----------------------------
# Grid axis 0 = transformer layer ("arbitrary").  Activations live in x_scr across
# layers; per-layer weights are DMA'd per grid step (double-buffered by Pallas).
def _fused_forward_kernel(
    x_ref, bias_ref,
    emb_g_ref, emb_b_ref,
    wqkv_ref, bqkv_ref, wo_ref, bo_ref, ln1_g_ref, ln1_b_ref,
    w1_ref, b1_ref, w2_ref, b2_ref, ln2_g_ref, ln2_b_ref,
    out_w_ref, out_b_ref,
    o_ref,
    x_scr, ctx_scr,
    *, batch, seq,
):
    l = pl.program_id(0)
    scale = 1.0 / math.sqrt(HEAD_DIM)

    # ---- layer 0: load embeddings (bf16 -> f32) and apply embedding LayerNorm ----
    @pl.when(l == 0)
    def _():
        x0 = x_ref[...].astype(jnp.float32)                # [B*S, H]
        x_scr[...] = _layernorm(x0, emb_g_ref[...], emb_b_ref[...])

    x = x_scr[...]                                          # [B*S, H] f32
    bias = bias_ref[...]                                    # [B*S, B*S] block-diag additive mask

    # ---------------- multi-head self-attention (fused QKV, whole batch) ----------
    qkv = _mm(x, wqkv_ref[0]) + bqkv_ref[0]                 # [B*S, 3H] f32
    q = qkv[:, 0:HIDDEN]
    k = qkv[:, HIDDEN:2 * HIDDEN]
    v = qkv[:, 2 * HIDDEN:3 * HIDDEN]

    for h in range(N_HEADS):                                # heads = static 64-lane slices
        sl = slice(h * HEAD_DIM, (h + 1) * HEAD_DIM)
        qh = q[:, sl].astype(WDTYPE)
        kh = k[:, sl].astype(WDTYPE)
        vh = v[:, sl].astype(WDTYPE)
        s_ = jax.lax.dot_general(                           # q @ k.T -> [B*S, B*S]
            qh, kh, (((1,), (1,)), ((), ())),
            preferred_element_type=jnp.float32)
        s_ = s_ * scale + bias                              # cross-batch + pad keys masked to -1e9
        s_ = s_ - jnp.max(s_, axis=-1, keepdims=True)
        p = jnp.exp(s_)
        p = p * pl.reciprocal(jnp.sum(p, axis=-1, keepdims=True), approx=True)
        # write each head's PV result at its static 64-lane offset (no lane concat)
        ctx_scr[:, sl] = jnp.dot(p.astype(WDTYPE), vh, preferred_element_type=jnp.float32)

    ctx = ctx_scr[...]                                      # [B*S, H] lane-dense context
    attn_out = _mm(ctx, wo_ref[0]) + bo_ref[0]
    x = _layernorm(attn_out + x, ln1_g_ref[0], ln1_b_ref[0])

    # -------------------------------- FFN ----------------------------------
    hdn = _mm(x, w1_ref[0]) + b1_ref[0]
    hdn = jax.nn.gelu(hdn, approximate=GELU_APPROX)
    ffn = _mm(hdn, w2_ref[0]) + b2_ref[0]
    x = _layernorm(ffn + x, ln2_g_ref[0], ln2_b_ref[0])
    x_scr[...] = x                                          # carry to next layer

    # ------------- last layer: mean pooling + classifier (lane-dense) -------------
    @pl.when(l == pl.num_programs(0) - 1)
    def _():
        pooled = jnp.mean(x.reshape(batch, seq, HIDDEN), axis=1)   # [B, H] (torch.mean, incl. pads)
        # nn.Dropout(p=0.1): identity in eval mode
        logits = _mm(pooled, out_w_ref[...]) + out_b_ref[...]      # [B, 128] padded, unmasked store
        o_ref[...] = logits.astype(o_ref.dtype)


# ----------------------------- wrapper -----------------------------------------
def distilbert_transfer_forward(params, ids, mask):
    b, s = ids.shape
    bs = b * s
    L, H, F, C = N_LAYERS, HIDDEN, FFN_DIM, NUM_CATEGORIES

    # Embedding gather is glue in plain JAX (data-dependent gather); cast activations
    # to bf16 for the HBM->VMEM DMA and fold batch into the row (M) dimension.
    x = params["word_emb"][ids] + params["pos_emb"][None, :s, :]        # [B, S, H] f32
    x = x.reshape(bs, H).astype(WDTYPE)                                 # [B*S, H] bf16

    # Block-diagonal additive attention bias over the folded batch: a query row in
    # batch b may only attend to unmasked keys of the same batch. (At real S, loop
    # over B inside the kernel instead of building a [B*S, B*S] bias.)
    key_ok = mask.reshape(-1).astype(jnp.float32)                       # [B*S]
    bvec = jnp.repeat(jnp.arange(b), s)                                 # [B*S]
    same = (bvec[:, None] == bvec[None, :]).astype(jnp.float32)         # [B*S, B*S]
    attn_bias = (1.0 - same * key_ok[None, :]) * -1e9                   # [B*S, B*S]

    # Classifier padded to a lane-dense 128-wide slab (unmasked stores); sliced below.
    out_w_pad = jnp.zeros((H, LANE), WDTYPE).at[:, :C].set(params["out_w"])
    out_b_pad = jnp.zeros((1, LANE), DTYPE).at[:, :C].set(params["out_b"])

    def const_spec(shape):
        nd = len(shape)
        # NOTE: constant-index blocks are fetched once; at real DistilBERT scale also
        # mark them single-buffered (pipeline_mode=pl.Buffered(1)) to halve their VMEM.
        return pl.BlockSpec(shape, lambda l, _nd=nd: (0,) * _nd)

    def layer_spec(shape):                                   # per-layer weight tile
        return pl.BlockSpec(shape, lambda l: (l, 0, 0))

    logits_pad = pl.pallas_call(
        functools.partial(_fused_forward_kernel, batch=b, seq=s),
        out_shape=jax.ShapeDtypeStruct((b, LANE), DTYPE),
        grid=(L,),
        in_specs=[
            const_spec((bs, H)),                             # activations [B*S, H] bf16
            const_spec((bs, bs)),                            # block-diag attention bias
            const_spec((1, H)), const_spec((1, H)),          # embedding LN gamma/beta
            layer_spec((1, H, 3 * H)), layer_spec((1, 1, 3 * H)),   # fused QKV
            layer_spec((1, H, H)), layer_spec((1, 1, H)),           # output proj
            layer_spec((1, 1, H)), layer_spec((1, 1, H)),           # LN1
            layer_spec((1, H, F)), layer_spec((1, 1, F)),           # FFN in
            layer_spec((1, F, H)), layer_spec((1, 1, H)),           # FFN out
            layer_spec((1, 1, H)), layer_spec((1, 1, H)),           # LN2
            const_spec((H, LANE)), const_spec((1, LANE)),           # padded classifier
        ],
        out_specs=pl.BlockSpec((b, LANE), lambda l: (0, 0)),
        scratch_shapes=[
            pltpu.VMEM((bs, H), jnp.float32),                # x carried across layers
            pltpu.VMEM((bs, H), jnp.float32),                # per-head context assembly
        ],
        compiler_params=pltpu.CompilerParams(
            dimension_semantics=("arbitrary",),              # layer axis is sequential
            vmem_limit_bytes=32 * 1024 * 1024,               # size for per-layer weights x2 at scale
        ),
    )(
        x, attn_bias,
        params["emb_ln_g"], params["emb_ln_b"],
        params["wqkv"], params["bqkv"], params["wo"], params["bo"],
        params["ln1_g"], params["ln1_b"],
        params["w1"], params["b1"], params["w2"], params["b2"],
        params["ln2_g"], params["ln2_b"],
        out_w_pad, out_b_pad,
    )
    return logits_pad[:, :C]


# ----------------------------- params ------------------------------------------
def init_params(key):
    def nxt():
        nonlocal key
        key, sub = jax.random.split(key)
        return sub

    def w(shape):
        return (jax.random.normal(nxt(), shape, DTYPE) * 0.02).astype(WDTYPE)

    L, H, F, C = N_LAYERS, HIDDEN, FFN_DIM, NUM_CATEGORIES
    return {
        "word_emb": jax.random.normal(nxt(), (VOCAB, H), DTYPE) * 0.02,
        "pos_emb": jax.random.normal(nxt(), (MAX_POS, H), DTYPE) * 0.02,
        "emb_ln_g": jnp.ones((1, H), DTYPE),
        "emb_ln_b": jnp.zeros((1, H), DTYPE),
        # per-layer weights stacked along a leading layer axis; Q/K/V fused to [H, 3H]
        "wqkv": w((L, H, 3 * H)),
        "bqkv": jnp.zeros((L, 1, 3 * H), DTYPE),
        "wo": w((L, H, H)),
        "bo": jnp.zeros((L, 1, H), DTYPE),
        "ln1_g": jnp.ones((L, 1, H), DTYPE),
        "ln1_b": jnp.zeros((L, 1, H), DTYPE),
        "w1": w((L, H, F)),
        "b1": jnp.zeros((L, 1, F), DTYPE),
        "w2": w((L, F, H)),
        "b2": jnp.zeros((L, 1, H), DTYPE),
        "ln2_g": jnp.ones((L, 1, H), DTYPE),
        "ln2_b": jnp.zeros((L, 1, H), DTYPE),
        "out_w": w((H, C)),
        "out_b": jnp.zeros((1, C), DTYPE),
    }
    # TODO(synk): FeatNet (depnet) class definition not provided; only the no_dep=True
    # branch (BERT mean-pool -> Linear) is implemented.


# ----------------------------- main ---------------------------------------------
if __name__ == "__main__":
    key = jax.random.PRNGKey(0)
    pkey, ikey = jax.random.split(key)
    params = init_params(pkey)

    B, S = 2, 8
    ids = jax.random.randint(ikey, (B, S), 0, VOCAB, dtype=jnp.int32)
    mask = jnp.array([[1, 1, 1, 1, 1, 1, 1, 1],
                      [1, 1, 1, 1, 1, 1, 0, 0]], dtype=jnp.int32)

    logits = jax.jit(distilbert_transfer_forward)(params, ids, mask)
    jax.block_until_ready(logits)
    assert logits.shape == (B, NUM_CATEGORIES)
    assert bool(jnp.all(jnp.isfinite(logits)))
    print("KERNEL_OK")
</pallas_src>

<mosaic_0001>
module attributes {stable_mosaic.version = 11 : i64} {
  func.func @_fused_forward_kernel(%arg0: i32, %arg1: memref<16x128xbf16, #tpu.memory_space<vmem>>, %arg2: memref<16x16xf32, #tpu.memory_space<vmem>>, %arg3: memref<1x128xf32, #tpu.memory_space<vmem>>, %arg4: memref<1x128xf32, #tpu.memory_space<vmem>>, %arg5: memref<1x128x384xbf16, #tpu.memory_space<vmem>>, %arg6: memref<1x1x384xf32, #tpu.memory_space<vmem>>, %arg7: memref<1x128x128xbf16, #tpu.memory_space<vmem>>, %arg8: memref<1x1x128xf32, #tpu.memory_space<vmem>>, %arg9: memref<1x1x128xf32, #tpu.memory_space<vmem>>, %arg10: memref<1x1x128xf32, #tpu.memory_space<vmem>>, %arg11: memref<1x128x256xbf16, #tpu.memory_space<vmem>>, %arg12: memref<1x1x256xf32, #tpu.memory_space<vmem>>, %arg13: memref<1x256x128xbf16, #tpu.memory_space<vmem>>, %arg14: memref<1x1x128xf32, #tpu.memory_space<vmem>>, %arg15: memref<1x1x128xf32, #tpu.memory_space<vmem>>, %arg16: memref<1x1x128xf32, #tpu.memory_space<vmem>>, %arg17: memref<128x128xbf16, #tpu.memory_space<vmem>>, %arg18: memref<1x128xf32, #tpu.memory_space<vmem>>, %arg19: memref<2x128xf32, #tpu.memory_space<vmem>>, %arg20: memref<16x128xf32, #tpu.memory_space<vmem>>, %arg21: memref<16x128xf32, #tpu.memory_space<vmem>>) attributes {dimension_semantics = [#tpu.dimension_semantics<arbitrary>], iteration_bounds = array<i64: 2>, scalar_prefetch = 0 : i64, scratch_operands = 2 : i64, tpu.core_type = #tpu.core_type<tc>, window_params = [{pipeline_mode = #tpu.pipeline_mode<synchronous>, transform_indices = @transform_0, window_bounds = array<i64: 16, 128>}, {pipeline_mode = #tpu.pipeline_mode<synchronous>, transform_indices = @transform_1, window_bounds = array<i64: 16, 16>}, {pipeline_mode = #tpu.pipeline_mode<synchronous>, transform_indices = @transform_2, window_bounds = array<i64: 1, 128>}, {pipeline_mode = #tpu.pipeline_mode<synchronous>, transform_indices = @transform_3, window_bounds = array<i64: 1, 128>}, {transform_indices = @transform_4, window_bounds = array<i64: 1, 128, 384>}, {transform_indices = @transform_5, window_bounds = array<i64: 1, 1, 384>}, {transform_indices = @transform_6, window_bounds = array<i64: 1, 128, 128>}, {transform_indices = @transform_7, window_bounds = array<i64: 1, 1, 128>}, {transform_indices = @transform_8, window_bounds = array<i64: 1, 1, 128>}, {transform_indices = @transform_9, window_bounds = array<i64: 1, 1, 128>}, {transform_indices = @transform_10, window_bounds = array<i64: 1, 128, 256>}, {transform_indices = @transform_11, window_bounds = array<i64: 1, 1, 256>}, {transform_indices = @transform_12, window_bounds = array<i64: 1, 256, 128>}, {transform_indices = @transform_13, window_bounds = array<i64: 1, 1, 128>}, {transform_indices = @transform_14, window_bounds = array<i64: 1, 1, 128>}, {transform_indices = @transform_15, window_bounds = array<i64: 1, 1, 128>}, {pipeline_mode = #tpu.pipeline_mode<synchronous>, transform_indices = @transform_16, window_bounds = array<i64: 128, 128>}, {pipeline_mode = #tpu.pipeline_mode<synchronous>, transform_indices = @transform_17, window_bounds = array<i64: 1, 128>}, {pipeline_mode = #tpu.pipeline_mode<synchronous>, transform_indices = @transform_18, window_bounds = array<i64: 2, 128>}]} {
    %c0_i32 = arith.constant 0 : i32
    %0 = arith.cmpi eq, %arg0, %c0_i32 : i32
    %1 = arith.extui %0 : i1 to i32
    %c0_i32_0 = arith.constant 0 : i32
    %2 = arith.cmpi ne, %1, %c0_i32_0 : i32
    scf.if %2 {
      %c0_75 = arith.constant 0 : index
      %c0_76 = arith.constant 0 : index
      %158 = vector.load %arg1[%c0_75, %c0_76] : memref<16x128xbf16, #tpu.memory_space<vmem>>, vector<16x128xbf16>
      %159 = arith.extf %158 : vector<16x128xbf16> to vector<16x128xf32>
      %c0_77 = arith.constant 0 : index
      %c0_78 = arith.constant 0 : index
      %160 = vector.load %arg3[%c0_77, %c0_78] : memref<1x128xf32, #tpu.memory_space<vmem>>, vector<1x128xf32>
      %c0_79 = arith.constant 0 : index
      %c0_80 = arith.constant 0 : index
      %161 = vector.load %arg4[%c0_79, %c0_80] : memref<1x128xf32, #tpu.memory_space<vmem>>, vector<1x128xf32>
      %cst_81 = arith.constant dense<0.000000e+00> : vector<16xf32>
      %162 = vector.multi_reduction <add>, %159, %cst_81 [1] : vector<16x128xf32> to vector<16xf32>
      %163 = vector.shape_cast %162 : vector<16xf32> to vector<16x1xf32>
      %cst_82 = arith.constant 1.280000e+02 : f32
      %164 = vector.broadcast %cst_82 : f32 to vector<16x1xf32>
      %165 = arith.divf %163, %164 : vector<16x1xf32>
      %166 = vector.broadcast %165 : vector<16x1xf32> to vector<16x128xf32>
      %167 = arith.subf %159, %166 : vector<16x128xf32>
      %168 = arith.mulf %167, %167 : vector<16x128xf32>
      %cst_83 = arith.constant dense<0.000000e+00> : vector<16xf32>
      %169 = vector.multi_reduction <add>, %168, %cst_83 [1] : vector<16x128xf32> to vector<16xf32>
      %170 = vector.shape_cast %169 : vector<16xf32> to vector<16x1xf32>
      %cst_84 = arith.constant 1.280000e+02 : f32
      %171 = vector.broadcast %cst_84 : f32 to vector<16x1xf32>
      %172 = arith.divf %170, %171 : vector<16x1xf32>
      %173 = vector.broadcast %165 : vector<16x1xf32> to vector<16x128xf32>
      %174 = arith.subf %159, %173 : vector<16x128xf32>
      %cst_85 = arith.constant 9.99999996E-13 : f32
      %175 = vector.broadcast %cst_85 : f32 to vector<16x1xf32>
      %176 = arith.addf %172, %175 : vector<16x1xf32>
      %177 = math.rsqrt %176 : vector<16x1xf32>
      %178 = vector.broadcast %177 : vector<16x1xf32> to vector<16x128xf32>
      %179 = arith.mulf %174, %178 : vector<16x128xf32>
      %180 = vector.broadcast %160 : vector<1x128xf32> to vector<16x128xf32>
      %181 = arith.mulf %179, %180 : vector<16x128xf32>
      %182 = vector.broadcast %161 : vector<1x128xf32> to vector<16x128xf32>
      %183 = arith.addf %181, %182 : vector<16x128xf32>
      %c0_86 = arith.constant 0 : index
      %c0_87 = arith.constant 0 : index
      %184 = vector.load %arg20[%c0_86, %c0_87] : memref<16x128xf32, #tpu.memory_space<vmem>>, vector<16x128xf32>
      tpu.vector_store %arg20[%c0_86, %c0_87], %183 {strides = array<i32>} : memref<16x128xf32, #tpu.memory_space<vmem>>, vector<16x128xf32>,
    } else {
    }
    %c0 = arith.constant 0 : index
    %c0_1 = arith.constant 0 : index
    %3 = vector.load %arg20[%c0, %c0_1] : memref<16x128xf32, #tpu.memory_space<vmem>>, vector<16x128xf32>
    %c0_2 = arith.constant 0 : index
    %c0_3 = arith.constant 0 : index
    %4 = vector.load %arg2[%c0_2, %c0_3] : memref<16x16xf32, #tpu.memory_space<vmem>>, vector<16x16xf32>
    %c0_4 = arith.constant 0 : index
    %c0_5 = arith.constant 0 : index
    %c0_6 = arith.constant 0 : index
    %5 = vector.load %arg5[%c0_4, %c0_5, %c0_6] : memref<1x128x384xbf16, #tpu.memory_space<vmem>>, vector<1x128x384xbf16>
    %6 = vector.shape_cast %5 : vector<1x128x384xbf16> to vector<128x384xbf16>
    %7 = arith.truncf %3 : vector<16x128xf32> to vector<16x128xbf16>
    %cst = arith.constant dense<0.000000e+00> : vector<16x384xf32>
    %8 = tpu.matmul %7, %6, %cst {dimension_numbers = #tpu.dot_dimension_numbers<[1], [0], [0], [1], [0, 0, 1, 1], [], []>} : vector<16x128xbf16>, vector<128x384xbf16>, vector<16x384xf32> -> vector<16x384xf32>
    %c0_7 = arith.constant 0 : index
    %c0_8 = arith.constant 0 : index
    %c0_9 = arith.constant 0 : index
    %9 = vector.load %arg6[%c0_7, %c0_8, %c0_9] : memref<1x1x384xf32, #tpu.memory_space<vmem>>, vector<1x1x384xf32>
    %10 = vector.shape_cast %9 : vector<1x1x384xf32> to vector<1x384xf32>
    %11 = vector.broadcast %10 : vector<1x384xf32> to vector<16x384xf32>
    %12 = arith.addf %8, %11 : vector<16x384xf32>
    %13 = vector.extract_strided_slice %12 {offsets = [0, 0], sizes = [16, 128], strides = [1, 1]} : vector<16x384xf32> to vector<16x128xf32>
    %14 = vector.extract_strided_slice %12 {offsets = [0, 128], sizes = [16, 128], strides = [1, 1]} : vector<16x384xf32> to vector<16x128xf32>
    %15 = vector.extract_strided_slice %12 {offsets = [0, 256], sizes = [16, 128], strides = [1, 1]} : vector<16x384xf32> to vector<16x128xf32>
    %16 = vector.extract_strided_slice %13 {offsets = [0, 0], sizes = [16, 64], strides = [1, 1]} : vector<16x128xf32> to vector<16x64xf32>
    %17 = arith.truncf %16 : vector<16x64xf32> to vector<16x64xbf16>
    %18 = vector.extract_strided_slice %14 {offsets = [0, 0], sizes = [16, 64], strides = [1, 1]} : vector<16x128xf32> to vector<16x64xf32>
    %19 = arith.truncf %18 : vector<16x64xf32> to vector<16x64xbf16>
    %20 = vector.extract_strided_slice %15 {offsets = [0, 0], sizes = [16, 64], strides = [1, 1]} : vector<16x128xf32> to vector<16x64xf32>
    %21 = arith.truncf %20 : vector<16x64xf32> to vector<16x64xbf16>
    %cst_10 = arith.constant dense<0.000000e+00> : vector<16x16xf32>
    %22 = tpu.matmul %17, %19, %cst_10 {dimension_numbers = #tpu.dot_dimension_numbers<[1], [1], [0], [0], [0, 0, 1, 0], [], []>} : vector<16x64xbf16>, vector<16x64xbf16>, vector<16x16xf32> -> vector<16x16xf32>
    %cst_11 = arith.constant 1.250000e-01 : f32
    %23 = vector.broadcast %cst_11 : f32 to vector<16x16xf32>
    %24 = arith.mulf %22, %23 : vector<16x16xf32>
    %25 = arith.addf %24, %4 : vector<16x16xf32>
    %cst_12 = arith.constant dense<0xFF800000> : vector<16xf32>
    %26 = vector.multi_reduction <maximumf>, %25, %cst_12 [1] : vector<16x16xf32> to vector<16xf32>
    %27 = vector.shape_cast %26 : vector<16xf32> to vector<16x1xf32>
    %28 = vector.broadcast %27 : vector<16x1xf32> to vector<16x16xf32>
    %29 = arith.subf %25, %28 : vector<16x16xf32>
    %30 = math.exp %29 : vector<16x16xf32>
    %cst_13 = arith.constant dense<0.000000e+00> : vector<16xf32>
    %31 = vector.multi_reduction <add>, %30, %cst_13 [1] : vector<16x16xf32> to vector<16xf32>
    %32 = vector.shape_cast %31 : vector<16xf32> to vector<16x1xf32>
    %33 = tpu.reciprocal %32 {approx = true} : vector<16x1xf32> -> vector<16x1xf32>
    %34 = vector.broadcast %33 : vector<16x1xf32> to vector<16x16xf32>
    %35 = arith.mulf %30, %34 : vector<16x16xf32>
    %36 = arith.truncf %35 : vector<16x16xf32> to vector<16x16xbf16>
    %cst_14 = arith.constant dense<0.000000e+00> : vector<16x64xf32>
    %37 = tpu.matmul %36, %21, %cst_14 {dimension_numbers = #tpu.dot_dimension_numbers<[1], [0], [0], [1], [0, 0, 1, 1], [], []>} : vector<16x16xbf16>, vector<16x64xbf16>, vector<16x64xf32> -> vector<16x64xf32>
    %c0_15 = arith.constant 0 : index
    %c0_16 = arith.constant 0 : index
    %38 = vector.load %arg21[%c0_15, %c0_16] : memref<16x128xf32, #tpu.memory_space<vmem>>, vector<16x64xf32>
    tpu.vector_store %arg21[%c0_15, %c0_16], %37 {strides = array<i32>} : memref<16x128xf32, #tpu.memory_space<vmem>>, vector<16x64xf32>,
    %39 = vector.extract_strided_slice %13 {offsets = [0, 64], sizes = [16, 64], strides = [1, 1]} : vector<16x128xf32> to vector<16x64xf32>
    %40 = arith.truncf %39 : vector<16x64xf32> to vector<16x64xbf16>
    %41 = vector.extract_strided_slice %14 {offsets = [0, 64], sizes = [16, 64], strides = [1, 1]} : vector<16x128xf32> to vector<16x64xf32>
    %42 = arith.truncf %41 : vector<16x64xf32> to vector<16x64xbf16>
    %43 = vector.extract_strided_slice %15 {offsets = [0, 64], sizes = [16, 64], strides = [1, 1]} : vector<16x128xf32> to vector<16x64xf32>
    %44 = arith.truncf %43 : vector<16x64xf32> to vector<16x64xbf16>
    %cst_17 = arith.constant dense<0.000000e+00> : vector<16x16xf32>
    %45 = tpu.matmul %40, %42, %cst_17 {dimension_numbers = #tpu.dot_dimension_numbers<[1], [1], [0], [0], [0, 0, 1, 0], [], []>} : vector<16x64xbf16>, vector<16x64xbf16>, vector<16x16xf32> -> vector<16x16xf32>
    %cst_18 = arith.constant 1.250000e-01 : f32
    %46 = vector.broadcast %cst_18 : f32 to vector<16x16xf32>
    %47 = arith.mulf %45, %46 : vector<16x16xf32>
    %48 = arith.addf %47, %4 : vector<16x16xf32>
    %cst_19 = arith.constant dense<0xFF800000> : vector<16xf32>
    %49 = vector.multi_reduction <maximumf>, %48, %cst_19 [1] : vector<16x16xf32> to vector<16xf32>
    %50 = vector.shape_cast %49 : vector<16xf32> to vector<16x1xf32>
    %51 = vector.broadcast %50 : vector<16x1xf32> to vector<16x16xf32>
    %52 = arith.subf %48, %51 : vector<16x16xf32>
    %53 = math.exp %52 : vector<16x16xf32>
    %cst_20 = arith.constant dense<0.000000e+00> : vector<16xf32>
    %54 = vector.multi_reduction <add>, %53, %cst_20 [1] : vector<16x16xf32> to vector<16xf32>
    %55 = vector.shape_cast %54 : vector<16xf32> to vector<16x1xf32>
    %56 = tpu.reciprocal %55 {approx = true} : vector<16x1xf32> -> vector<16x1xf32>
    %57 = vector.broadcast %56 : vector<16x1xf32> to vector<16x16xf32>
    %58 = arith.mulf %53, %57 : vector<16x16xf32>
    %59 = arith.truncf %58 : vector<16x16xf32> to vector<16x16xbf16>
    %cst_21 = arith.constant dense<0.000000e+00> : vector<16x64xf32>
    %60 = tpu.matmul %59, %44, %cst_21 {dimension_numbers = #tpu.dot_dimension_numbers<[1], [0], [0], [1], [0, 0, 1, 1], [], []>} : vector<16x16xbf16>, vector<16x64xbf16>, vector<16x64xf32> -> vector<16x64xf32>
    %c0_22 = arith.constant 0 : index
    %c64 = arith.constant 64 : index
    %61 = vector.load %arg21[%c0_22, %c64] : memref<16x128xf32, #tpu.memory_space<vmem>>, vector<16x64xf32>
    tpu.vector_store %arg21[%c0_22, %c64], %60 {strides = array<i32>} : memref<16x128xf32, #tpu.memory_space<vmem>>, vector<16x64xf32>,
    %c0_23 = arith.constant 0 : index
    %c0_24 = arith.constant 0 : index
    %62 = vector.load %arg21[%c0_23, %c0_24] : memref<16x128xf32, #tpu.memory_space<vmem>>, vector<16x128xf32>
    %c0_25 = arith.constant 0 : index
    %c0_26 = arith.constant 0 : index
    %c0_27 = arith.constant 0 : index
    %63 = vector.load %arg7[%c0_25, %c0_26, %c0_27] : memref<1x128x128xbf16, #tpu.memory_space<vmem>>, vector<1x128x128xbf16>
    %64 = vector.shape_cast %63 : vector<1x128x128xbf16> to vector<128x128xbf16>
    %65 = arith.truncf %62 : vector<16x128xf32> to vector<16x128xbf16>
    %cst_28 = arith.constant dense<0.000000e+00> : vector<16x128xf32>
    %66 = tpu.matmul %65, %64, %cst_28 {dimension_numbers = #tpu.dot_dimension_numbers<[1], [0], [0], [1], [0, 0, 1, 1], [], []>} : vector<16x128xbf16>, vector<128x128xbf16>, vector<16x128xf32> -> vector<16x128xf32>
    %c0_29 = arith.constant 0 : index
    %c0_30 = arith.constant 0 : index
    %c0_31 = arith.constant 0 : index
    %67 = vector.load %arg8[%c0_29, %c0_30, %c0_31] : memref<1x1x128xf32, #tpu.memory_space<vmem>>, vector<1x1x128xf32>
    %68 = vector.shape_cast %67 : vector<1x1x128xf32> to vector<1x128xf32>
    %69 = vector.broadcast %68 : vector<1x128xf32> to vector<16x128xf32>
    %70 = arith.addf %66, %69 : vector<16x128xf32>
    %71 = arith.addf %70, %3 : vector<16x128xf32>
    %c0_32 = arith.constant 0 : index
    %c0_33 = arith.constant 0 : index
    %c0_34 = arith.constant 0 : index
    %72 = vector.load %arg9[%c0_32, %c0_33, %c0_34] : memref<1x1x128xf32, #tpu.memory_space<vmem>>, vector<1x1x128xf32>
    %73 = vector.shape_cast %72 : vector<1x1x128xf32> to vector<1x128xf32>
    %c0_35 = arith.constant 0 : index
    %c0_36 = arith.constant 0 : index
    %c0_37 = arith.constant 0 : index
    %74 = vector.load %arg10[%c0_35, %c0_36, %c0_37] : memref<1x1x128xf32, #tpu.memory_space<vmem>>, vector<1x1x128xf32>
    %75 = vector.shape_cast %74 : vector<1x1x128xf32> to vector<1x128xf32>
    %cst_38 = arith.constant dense<0.000000e+00> : vector<16xf32>
    %76 = vector.multi_reduction <add>, %71, %cst_38 [1] : vector<16x128xf32> to vector<16xf32>
    %77 = vector.shape_cast %76 : vector<16xf32> to vector<16x1xf32>
    %cst_39 = arith.constant 1.280000e+02 : f32
    %78 = vector.broadcast %cst_39 : f32 to vector<16x1xf32>
    %79 = arith.divf %77, %78 : vector<16x1xf32>
    %80 = vector.broadcast %79 : vector<16x1xf32> to vector<16x128xf32>
    %81 = arith.subf %71, %80 : vector<16x128xf32>
    %82 = arith.mulf %81, %81 : vector<16x128xf32>
    %cst_40 = arith.constant dense<0.000000e+00> : vector<16xf32>
    %83 = vector.multi_reduction <add>, %82, %cst_40 [1] : vector<16x128xf32> to vector<16xf32>
    %84 = vector.shape_cast %83 : vector<16xf32> to vector<16x1xf32>
    %cst_41 = arith.constant 1.280000e+02 : f32
    %85 = vector.broadcast %cst_41 : f32 to vector<16x1xf32>
    %86 = arith.divf %84, %85 : vector<16x1xf32>
    %87 = vector.broadcast %79 : vector<16x1xf32> to vector<16x128xf32>
    %88 = arith.subf %71, %87 : vector<16x128xf32>
    %cst_42 = arith.constant 9.99999996E-13 : f32
    %89 = vector.broadcast %cst_42 : f32 to vector<16x1xf32>
    %90 = arith.addf %86, %89 : vector<16x1xf32>
    %91 = math.rsqrt %90 : vector<16x1xf32>
    %92 = vector.broadcast %91 : vector<16x1xf32> to vector<16x128xf32>
    %93 = arith.mulf %88, %92 : vector<16x128xf32>
    %94 = vector.broadcast %73 : vector<1x128xf32> to vector<16x128xf32>
    %95 = arith.mulf %93, %94 : vector<16x128xf32>
    %96 = vector.broadcast %75 : vector<1x128xf32> to vector<16x128xf32>
    %97 = arith.addf %95, %96 : vector<16x128xf32>
    %c0_43 = arith.constant 0 : index
    %c0_44 = arith.constant 0 : index
    %c0_45 = arith.constant 0 : index
    %98 = vector.load %arg11[%c0_43, %c0_44, %c0_45] : memref<1x128x256xbf16, #tpu.memory_space<vmem>>, vector<1x128x256xbf16>
    %99 = vector.shape_cast %98 : vector<1x128x256xbf16> to vector<128x256xbf16>
    %100 = arith.truncf %97 : vector<16x128xf32> to vector<16x128xbf16>
    %cst_46 = arith.constant dense<0.000000e+00> : vector<16x256xf32>
    %101 = tpu.matmul %100, %99, %cst_46 {dimension_numbers = #tpu.dot_dimension_numbers<[1], [0], [0], [1], [0, 0, 1, 1], [], []>} : vector<16x128xbf16>, vector<128x256xbf16>, vector<16x256xf32> -> vector<16x256xf32>
    %c0_47 = arith.constant 0 : index
    %c0_48 = arith.constant 0 : index
    %c0_49 = arith.constant 0 : index
    %102 = vector.load %arg12[%c0_47, %c0_48, %c0_49] : memref<1x1x256xf32, #tpu.memory_space<vmem>>, vector<1x1x256xf32>
    %103 = vector.shape_cast %102 : vector<1x1x256xf32> to vector<1x256xf32>
    %104 = vector.broadcast %103 : vector<1x256xf32> to vector<16x256xf32>
    %105 = arith.addf %101, %104 : vector<16x256xf32>
    %106 = arith.mulf %105, %105 : vector<16x256xf32>
    %107 = arith.mulf %105, %106 : vector<16x256xf32>
    %cst_50 = arith.constant 4.471500e-02 : f32
    %108 = vector.broadcast %cst_50 : f32 to vector<16x256xf32>
    %109 = arith.mulf %108, %107 : vector<16x256xf32>
    %110 = arith.addf %105, %109 : vector<16x256xf32>
    %cst_51 = arith.constant 0.797884583 : f32
    %111 = vector.broadcast %cst_51 : f32 to vector<16x256xf32>
    %112 = arith.mulf %111, %110 : vector<16x256xf32>
    %113 = math.tanh %112 : vector<16x256xf32>
    %cst_52 = arith.constant 1.000000e+00 : f32
    %114 = vector.broadcast %cst_52 : f32 to vector<16x256xf32>
    %115 = arith.addf %114, %113 : vector<16x256xf32>
    %cst_53 = arith.constant 5.000000e-01 : f32
    %116 = vector.broadcast %cst_53 : f32 to vector<16x256xf32>
    %117 = arith.mulf %116, %115 : vector<16x256xf32>
    %118 = arith.mulf %105, %117 : vector<16x256xf32>
    %c0_54 = arith.constant 0 : index
    %c0_55 = arith.constant 0 : index
    %c0_56 = arith.constant 0 : index
    %119 = vector.load %arg13[%c0_54, %c0_55, %c0_56] : memref<1x256x128xbf16, #tpu.memory_space<vmem>>, vector<1x256x128xbf16>
    %120 = vector.shape_cast %119 : vector<1x256x128xbf16> to vector<256x128xbf16>
    %121 = arith.truncf %118 : vector<16x256xf32> to vector<16x256xbf16>
    %cst_57 = arith.constant dense<0.000000e+00> : vector<16x128xf32>
    %122 = tpu.matmul %121, %120, %cst_57 {dimension_numbers = #tpu.dot_dimension_numbers<[1], [0], [0], [1], [0, 0, 1, 1], [], []>} : vector<16x256xbf16>, vector<256x128xbf16>, vector<16x128xf32> -> vector<16x128xf32>
    %c0_58 = arith.constant 0 : index
    %c0_59 = arith.constant 0 : index
    %c0_60 = arith.constant 0 : index
    %123 = vector.load %arg14[%c0_58, %c0_59, %c0_60] : memref<1x1x128xf32, #tpu.memory_space<vmem>>, vector<1x1x128xf32>
    %124 = vector.shape_cast %123 : vector<1x1x128xf32> to vector<1x128xf32>
    %125 = vector.broadcast %124 : vector<1x128xf32> to vector<16x128xf32>
    %126 = arith.addf %122, %125 : vector<16x128xf32>
    %127 = arith.addf %126, %97 : vector<16x128xf32>
    %c0_61 = arith.constant 0 : index
    %c0_62 = arith.constant 0 : index
    %c0_63 = arith.constant 0 : index
    %128 = vector.load %arg15[%c0_61, %c0_62, %c0_63] : memref<1x1x128xf32, #tpu.memory_space<vmem>>, vector<1x1x128xf32>
    %129 = vector.shape_cast %128 : vector<1x1x128xf32> to vector<1x128xf32>
    %c0_64 = arith.constant 0 : index
    %c0_65 = arith.constant 0 : index
    %c0_66 = arith.constant 0 : index
    %130 = vector.load %arg16[%c0_64, %c0_65, %c0_66] : memref<1x1x128xf32, #tpu.memory_space<vmem>>, vector<1x1x128xf32>
    %131 = vector.shape_cast %130 : vector<1x1x128xf32> to vector<1x128xf32>
    %cst_67 = arith.constant dense<0.000000e+00> : vector<16xf32>
    %132 = vector.multi_reduction <add>, %127, %cst_67 [1] : vector<16x128xf32> to vector<16xf32>
    %133 = vector.shape_cast %132 : vector<16xf32> to vector<16x1xf32>
    %cst_68 = arith.constant 1.280000e+02 : f32
    %134 = vector.broadcast %cst_68 : f32 to vector<16x1xf32>
    %135 = arith.divf %133, %134 : vector<16x1xf32>
    %136 = vector.broadcast %135 : vector<16x1xf32> to vector<16x128xf32>
    %137 = arith.subf %127, %136 : vector<16x128xf32>
    %138 = arith.mulf %137, %137 : vector<16x128xf32>
    %cst_69 = arith.constant dense<0.000000e+00> : vector<16xf32>
    %139 = vector.multi_reduction <add>, %138, %cst_69 [1] : vector<16x128xf32> to vector<16xf32>
    %140 = vector.shape_cast %139 : vector<16xf32> to vector<16x1xf32>
    %cst_70 = arith.constant 1.280000e+02 : f32
    %141 = vector.broadcast %cst_70 : f32 to vector<16x1xf32>
    %142 = arith.divf %140, %141 : vector<16x1xf32>
    %143 = vector.broadcast %135 : vector<16x1xf32> to vector<16x128xf32>
    %144 = arith.subf %127, %143 : vector<16x128xf32>
    %cst_71 = arith.constant 9.99999996E-13 : f32
    %145 = vector.broadcast %cst_71 : f32 to vector<16x1xf32>
    %146 = arith.addf %142, %145 : vector<16x1xf32>
    %147 = math.rsqrt %146 : vector<16x1xf32>
    %148 = vector.broadcast %147 : vector<16x1xf32> to vector<16x128xf32>
    %149 = arith.mulf %144, %148 : vector<16x128xf32>
    %150 = vector.broadcast %129 : vector<1x128xf32> to vector<16x128xf32>
    %151 = arith.mulf %149, %150 : vector<16x128xf32>
    %152 = vector.broadcast %131 : vector<1x128xf32> to vector<16x128xf32>
    %153 = arith.addf %151, %152 : vector<16x128xf32>
    %c0_72 = arith.constant 0 : index
    %c0_73 = arith.constant 0 : index
    %154 = vector.load %arg20[%c0_72, %c0_73] : memref<16x128xf32, #tpu.memory_space<vmem>>, vector<16x128xf32>
    tpu.vector_store %arg20[%c0_72, %c0_73], %153 {strides = array<i32>} : memref<16x128xf32, #tpu.memory_space<vmem>>, vector<16x128xf32>,
    %c1_i32 = arith.constant 1 : i32
    %155 = arith.cmpi eq, %arg0, %c1_i32 : i32
    %156 = arith.extui %155 : i1 to i32
    %c0_i32_74 = arith.constant 0 : i32
    %157 = arith.cmpi ne, %156, %c0_i32_74 : i32
    scf.if %157 {
      %158 = vector.shape_cast %153 : vector<16x128xf32> to vector<2x8x128xf32>
      %cst_75 = arith.constant dense<0.000000e+00> : vector<2x128xf32>
      %159 = vector.multi_reduction <add>, %158, %cst_75 [1] : vector<2x8x128xf32> to vector<2x128xf32>
      %cst_76 = arith.constant 8.000000e+00 : f32
      %160 = vector.broadcast %cst_76 : f32 to vector<2x128xf32>
      %161 = arith.divf %159, %160 : vector<2x128xf32>
      %c0_77 = arith.constant 0 : index
      %c0_78 = arith.constant 0 : index
      %162 = vector.load %arg17[%c0_77, %c0_78] : memref<128x128xbf16, #tpu.memory_space<vmem>>, vector<128x128xbf16>
      %163 = arith.truncf %161 : vector<2x128xf32> to vector<2x128xbf16>
      %cst_79 = arith.constant dense<0.000000e+00> : vector<2x128xf32>
      %164 = tpu.matmul %163, %162, %cst_79 {dimension_numbers = #tpu.dot_dimension_numbers<[1], [0], [0], [1], [0, 0, 1, 1], [], []>} : vector<2x128xbf16>, vector<128x128xbf16>, vector<2x128xf32> -> vector<2x128xf32>
      %c0_80 = arith.constant 0 : index
      %c0_81 = arith.constant 0 : index
      %165 = vector.load %arg18[%c0_80, %c0_81] : memref<1x128xf32, #tpu.memory_space<vmem>>, vector<1x128xf32>
      %166 = vector.broadcast %165 : vector<1x128xf32> to vector<2x128xf32>
      %167 = arith.addf %164, %166 : vector<2x128xf32>
      %c0_82 = arith.constant 0 : index
      %c0_83 = arith.constant 0 : index
      %168 = vector.load %arg19[%c0_82, %c0_83] : memref<2x128xf32, #tpu.memory_space<vmem>>, vector<2x128xf32>
      tpu.vector_store %arg19[%c0_82, %c0_83], %167 {strides = array<i32>} : memref<2x128xf32, #tpu.memory_space<vmem>>, vector<2x128xf32>,
    } else {
    }
    return
  }
  func.func @transform_0(%arg0: i32) -> (i32, i32) {
    %c0_i32 = arith.constant 0 : i32
    %c0_i32_0 = arith.constant 0 : i32
    %c0_i32_1 = arith.constant 0 : i32
    return %c0_i32, %c0_i32_0 : i32, i32
  }
  func.func @transform_1(%arg0: i32) -> (i32, i32) {
    %c0_i32 = arith.constant 0 : i32
    %c0_i32_0 = arith.constant 0 : i32
    %c0_i32_1 = arith.constant 0 : i32
    return %c0_i32, %c0_i32_0 : i32, i32
  }
  func.func @transform_2(%arg0: i32) -> (i32, i32) {
    %c0_i32 = arith.constant 0 : i32
    %c0_i32_0 = arith.constant 0 : i32
    %c0_i32_1 = arith.constant 0 : i32
    return %c0_i32, %c0_i32_0 : i32, i32
  }
  func.func @transform_3(%arg0: i32) -> (i32, i32) {
    %c0_i32 = arith.constant 0 : i32
    %c0_i32_0 = arith.constant 0 : i32
    %c0_i32_1 = arith.constant 0 : i32
    return %c0_i32, %c0_i32_0 : i32, i32
  }
  func.func @transform_4(%arg0: i32) -> (i32, i32, i32) {
    %c0_i32 = arith.constant 0 : i32
    %c0_i32_0 = arith.constant 0 : i32
    %c0_i32_1 = arith.constant 0 : i32
    return %arg0, %c0_i32, %c0_i32_0 : i32, i32, i32
  }
  func.func @transform_5(%arg0: i32) -> (i32, i32, i32) {
    %c0_i32 = arith.constant 0 : i32
    %c0_i32_0 = arith.constant 0 : i32
    %c0_i32_1 = arith.constant 0 : i32
    return %arg0, %c0_i32, %c0_i32_0 : i32, i32, i32
  }
  func.func @transform_6(%arg0: i32) -> (i32, i32, i32) {
    %c0_i32 = arith.constant 0 : i32
    %c0_i32_0 = arith.constant 0 : i32
    %c0_i32_1 = arith.constant 0 : i32
    return %arg0, %c0_i32, %c0_i32_0 : i32, i32, i32
  }
  func.func @transform_7(%arg0: i32) -> (i32, i32, i32) {
    %c0_i32 = arith.constant 0 : i32
    %c0_i32_0 = arith.constant 0 : i32
    %c0_i32_1 = arith.constant 0 : i32
    return %arg0, %c0_i32, %c0_i32_0 : i32, i32, i32
  }
  func.func @transform_8(%arg0: i32) -> (i32, i32, i32) {
    %c0_i32 = arith.constant 0 : i32
    %c0_i32_0 = arith.constant 0 : i32
    %c0_i32_1 = arith.constant 0 : i32
    return %arg0, %c0_i32, %c0_i32_0 : i32, i32, i32
  }
  func.func @transform_9(%arg0: i32) -> (i32, i32, i32) {
    %c0_i32 = arith.constant 0 : i32
    %c0_i32_0 = arith.constant 0 : i32
    %c0_i32_1 = arith.constant 0 : i32
    return %arg0, %c0_i32, %c0_i32_0 : i32, i32, i32
  }
  func.func @transform_10(%arg0: i32) -> (i32, i32, i32) {
    %c0_i32 = arith.constant 0 : i32
    %c0_i32_0 = arith.constant 0 : i32
    %c0_i32_1 = arith.constant 0 : i32
    return %arg0, %c0_i32, %c0_i32_0 : i32, i32, i32
  }
  func.func @transform_11(%arg0: i32) -> (i32, i32, i32) {
    %c0_i32 = arith.constant 0 : i32
    %c0_i32_0 = arith.constant 0 : i32
    %c0_i32_1 = arith.constant 0 : i32
    return %arg0, %c0_i32, %c0_i32_0 : i32, i32, i32
  }
  func.func @transform_12(%arg0: i32) -> (i32, i32, i32) {
    %c0_i32 = arith.constant 0 : i32
    %c0_i32_0 = arith.constant 0 : i32
    %c0_i32_1 = arith.constant 0 : i32
    return %arg0, %c0_i32, %c0_i32_0 : i32, i32, i32
  }
  func.func @transform_13(%arg0: i32) -> (i32, i32, i32) {
    %c0_i32 = arith.constant 0 : i32
    %c0_i32_0 = arith.constant 0 : i32
    %c0_i32_1 = arith.constant 0 : i32
    return %arg0, %c0_i32, %c0_i32_0 : i32, i32, i32
  }
  func.func @transform_14(%arg0: i32) -> (i32, i32, i32) {
    %c0_i32 = arith.constant 0 : i32
    %c0_i32_0 = arith.constant 0 : i32
    %c0_i32_1 = arith.constant 0 : i32
    return %arg0, %c0_i32, %c0_i32_0 : i32, i32, i32
  }
  func.func @transform_15(%arg0: i32) -> (i32, i32, i32) {
    %c0_i32 = arith.constant 0 : i32
    %c0_i32_0 = arith.constant 0 : i32
    %c0_i32_1 = arith.constant 0 : i32
    return %arg0, %c0_i32, %c0_i32_0 : i32, i32, i32
  }
  func.func @transform_16(%arg0: i32) -> (i32, i32) {
    %c0_i32 = arith.constant 0 : i32
    %c0_i32_0 = arith.constant 0 : i32
    %c0_i32_1 = arith.constant 0 : i32
    return %c0_i32, %c0_i32_0 : i32, i32
  }
  func.func @transform_17(%arg0: i32) -> (i32, i32) {
    %c0_i32 = arith.constant 0 : i32
    %c0_i32_0 = arith.constant 0 : i32
    %c0_i32_1 = arith.constant 0 : i32
    return %c0_i32, %c0_i32_0 : i32, i32
  }
  func.func @transform_18(%arg0: i32) -> (i32, i32) {
    %c0_i32 = arith.constant 0 : i32
    %c0_i32_0 = arith.constant 0 : i32
    %c0_i32_1 = arith.constant 0 : i32
    return %c0_i32, %c0_i32_0 : i32, i32
  }
}

</mosaic_0001>

<llo_original>
// kernel: distilbert_transfer_forward.1
$region0: #{distilbert_transfer_forward.1}
  #allocation0 [shape = 'u32[]', space=smem, size = 0x4, offset = 0x4, fixed_abs, tag = 'smem constant byte address 0x4 - core index']
  #allocation1 [shape = 'u32[72,128]{1,0:T(1,128)}', space=vmem, size = 0x9000, scoped, tag = 'internal scratch']
  #allocation2 [shape = 'f32[16,128]{1,0:T(8,128)}', space=vmem, size = 0x2000, scoped, tag = 'scratch operand']
  #allocation3 [shape = 'f32[16,128]{1,0:T(8,128)}', space=vmem, size = 0x2000, scoped, tag = 'scratch operand']
  %s0 = inlined_call_operand.vmem [shape: bf16[16,128], index: 0, kind: input, shape index: {}]
  %s1 = inlined_call_operand.vmem [shape: f32[16,16], index: 1, kind: input, shape index: {}]
  %s2 = inlined_call_operand.vmem [shape: f32[1,128], index: 2, kind: input, shape index: {}]
  %s3 = inlined_call_operand.vmem [shape: f32[1,128], index: 3, kind: input, shape index: {}]
  %s4 = inlined_call_operand.hbm [shape: bf16[2,128,384], index: 4, kind: input, shape index: {}]
  %s5 = inlined_call_operand.vmem [shape: f32[2,1,384], index: 5, kind: input, shape index: {}]
  %s6 = inlined_call_operand.vmem [shape: bf16[2,128,128], index: 6, kind: input, shape index: {}]
  %s7 = inlined_call_operand.vmem [shape: f32[2,1,128], index: 7, kind: input, shape index: {}]
  %s8 = inlined_call_operand.vmem [shape: f32[2,1,128], index: 8, kind: input, shape index: {}]
  %s9 = inlined_call_operand.vmem [shape: f32[2,1,128], index: 9, kind: input, shape index: {}]
  %s10 = inlined_call_operand.vmem [shape: bf16[2,128,256], index: 10, kind: input, shape index: {}]
  %s11 = inlined_call_operand.vmem [shape: f32[2,1,256], index: 11, kind: input, shape index: {}]
  %s12 = inlined_call_operand.hbm [shape: bf16[2,256,128], index: 12, kind: input, shape index: {}]
  %s13 = inlined_call_operand.vmem [shape: f32[2,1,128], index: 13, kind: input, shape index: {}]
  %s14 = inlined_call_operand.vmem [shape: f32[2,1,128], index: 14, kind: input, shape index: {}]
  %s15 = inlined_call_operand.vmem [shape: f32[2,1,128], index: 15, kind: input, shape index: {}]
  %s16 = inlined_call_operand.vmem [shape: bf16[128,128], index: 16, kind: input, shape index: {}]
  %s17 = inlined_call_operand.vmem [shape: f32[1,128], index: 17, kind: input, shape index: {}]
  %s18 = inlined_call_operand.hbm [shape: f32[2,128], index: 18, kind: output, shape index: {}]
  %s19 = sld [smem:[#allocation0]]
  $region121: #{distilbert_transfer_forward.1} parent=0
    _
  %s21 = ssub.s32 1, %s19
  %s22 = scalar_select 0, %s21, %s19
  $region1: #{distilbert_transfer_forward.1} parent=0
    #allocation4 [shape = 'u8[196608]{0}', space=vmem, size = 0x30000, scoped, tag = 'input window, operand 4']
    #allocation5 [shape = 's32[2]{0}', space=sflag, size = 0x8, scoped, tag = 'scoped memory for distilbert_transfer_forward.1']
    #allocation6 [shape = 's32[2]{0}', space=sflag, size = 0x8, scoped, tag = 'scoped memory for distilbert_transfer_forward.1']
    #allocation7 [shape = 'u8[131072]{0}', space=vmem, size = 0x20000, scoped, tag = 'input window, operand 12']
    #allocation8 [shape = 's32[2]{0}', space=sflag, size = 0x8, scoped, tag = 'scoped memory for distilbert_transfer_forward.1']
    #allocation9 [shape = 'u8[1024]{0}', space=vmem, size = 0x400, scoped, tag = 'output window, operand 0, single buffered']
    %23 = vsyncpa [#allocation5], 0
    %s24 = scalar_lea.sflag [#allocation5], 1
    %25 = vsyncpa %s24, 0
    %26 = vsyncpa [#allocation8], 0
    %s27 = scalar_lea.sflag [#allocation8], 1
    %28 = vsyncpa %s27, 0
    %29 = vsyncpa [#allocation6], 0
    loop: start=0, step=1, limit=4
    $region2: #{distilbert_transfer_forward.1} parent=1 // loop_pre_header
      _
    $region3: #{distilbert_transfer_forward.1} parent=1 // loop_header
      %s31 = sphi 0, %s35
      %p32 = scmp.ge.s32.totalorder %s31, 4
      %s39 = sphi 0, %s39
      %s41 = sphi 0, %s39
      %s42 = sphi 0, %s41
      %s56 = sphi 0, %s42
      %s60 = sphi 0, %s60
      %s62 = sphi 0, %s60
      %s63 = sphi 0, %s62
      %s77 = sphi 0, %s63
      %s81 = sphi 0, %s81
      %s83 = sphi 0, %s81
      %s84 = sphi 0, %s83
      %s98 = sphi 0, %s84
      %s102 = sphi 0, %s102
      %s104 = sphi 0, %s102
      %s105 = sphi 0, %s104
      %s119 = sphi 0, %s105
      %s125 = sphi 0, %s127
      %s128 = sphi 0, %s125
      %s129 = sphi 0, %s128
      %s145 = sphi 0, %s129
      %s151 = sphi 0, %s153
      %s154 = sphi 0, %s151
      %s155 = sphi 0, %s154
      %s171 = sphi 0, %s155
      %s177 = sphi 0, %s179
      %s180 = sphi 0, %s177
      %s181 = sphi 0, %s180
      %s197 = sphi 0, %s181
      %s203 = sphi 0, %s205
      %s206 = sphi 0, %s203
      %s207 = sphi 0, %s206
      %s223 = sphi 0, %s207
      %s229 = sphi 0, %s231
      %s232 = sphi 0, %s229
      %s233 = sphi 0, %s232
      %s249 = sphi 0, %s233
      %s255 = sphi 0, %s257
      %s258 = sphi 0, %s255
      %s259 = sphi 0, %s258
      %s275 = sphi 0, %s259
      %s281 = sphi 0, %s283
      %s284 = sphi 0, %s281
      %s285 = sphi 0, %s284
      %s301 = sphi 0, %s285
      %s307 = sphi 0, %s309
      %s310 = sphi 0, %s307
      %s311 = sphi 0, %s310
      %s327 = sphi 0, %s311
      %s333 = sphi 0, %s335
      %s336 = sphi 0, %s333
      %s337 = sphi 0, %s336
      %s353 = sphi 0, %s337
      %s359 = sphi 0, %s361
      %s362 = sphi 0, %s359
      %s363 = sphi 0, %s362
      %s379 = sphi 0, %s363
      %s385 = sphi 0, %s387
      %s388 = sphi 0, %s385
      %s389 = sphi 0, %s388
      %s405 = sphi 0, %s389
      %s411 = sphi 0, %s413
      %s414 = sphi 0, %s411
      %s415 = sphi 0, %s414
      %s431 = sphi 0, %s415
      %s435 = sphi 0, %s435
      %s437 = sphi 0, %s435
      %s438 = sphi 0, %s437
      %s452 = sphi 0, %s438
      %s456 = sphi 0, %s456
      %s458 = sphi 0, %s456
      %s459 = sphi 0, %s458
      %s473 = sphi 0, %s459
      %s477 = sphi 0, %s477
      %s479 = sphi 0, %s477
      %s480 = sphi 0, %s479
      %s494 = sphi 0, %s480
    $region4: #{distilbert_transfer_forward.1} parent=1 // loop_header_branch
      %34 = sbr.rel (%p32) target = $region8
    $region5: #{distilbert_transfer_forward.1} parent=1 // loop_body
      %s36 = ssub.s32 %s31, 1
      %s37 = ssub.s32 %s31, 2
      %s38 = sadd.s32 %s31, 1
      %s40 = sadd.s32 %s39, 1
      %p43 = scmp.eq.s32.totalorder %s31, 1
      %p44 = scmp.ne.s32.totalorder %s39, %s41
      %p45 = scmp.eq.s32.totalorder %s31, 0
      %p46 = por %p44, %p45
      %p47 = scmp.ne.s32.totalorder %s39, %s41
      %p48 = scmp.eq.s32.totalorder %s36, 1
      %p49 = por %p47, %p48
      %p50 = scmp.ne.s32.totalorder %s41, %s42
      %p51 = scmp.eq.s32.totalorder %s36, 0
      %p52 = por %p50, %p51
      %p53 = scmp.ne.s32.totalorder %s41, %s42
      %p54 = scmp.eq.s32.totalorder %s37, 1
      %p55 = por %p53, %p54
      %p57 = scmp.ne.s32.totalorder %s42, %s56
      %p58 = scmp.eq.s32.totalorder %s37, 0
      %p59 = por %p57, %p58
      %s61 = sadd.s32 %s60, 1
      %p64 = scmp.eq.s32.totalorder %s31, 1
      %p65 = scmp.ne.s32.totalorder %s60, %s62
      %p66 = scmp.eq.s32.totalorder %s31, 0
      %p67 = por %p65, %p66
      %p68 = scmp.ne.s32.totalorder %s60, %s62
      %p69 = scmp.eq.s32.totalorder %s36, 1
      %p70 = por %p68, %p69
      %p71 = scmp.ne.s32.totalorder %s62, %s63
      %p72 = scmp.eq.s32.totalorder %s36, 0
      %p73 = por %p71, %p72
      %p74 = scmp.ne.s32.totalorder %s62, %s63
      %p75 = scmp.eq.s32.totalorder %s37, 1
      %p76 = por %p74, %p75
      %p78 = scmp.ne.s32.totalorder %s63, %s77
      %p79 = scmp.eq.s32.totalorder %s37, 0
      %p80 = por %p78, %p79
      %s82 = sadd.s32 %s81, 1
      %p85 = scmp.eq.s32.totalorder %s31, 1
      %p86 = scmp.ne.s32.totalorder %s81, %s83
      %p87 = scmp.eq.s32.totalorder %s31, 0
      %p88 = por %p86, %p87
      %p89 = scmp.ne.s32.totalorder %s81, %s83
      %p90 = scmp.eq.s32.totalorder %s36, 1
      %p91 = por %p89, %p90
      %p92 = scmp.ne.s32.totalorder %s83, %s84
      %p93 = scmp.eq.s32.totalorder %s36, 0
      %p94 = por %p92, %p93
      %p95 = scmp.ne.s32.totalorder %s83, %s84
      %p96 = scmp.eq.s32.totalorder %s37, 1
      %p97 = por %p95, %p96
      %p99 = scmp.ne.s32.totalorder %s84, %s98
      %p100 = scmp.eq.s32.totalorder %s37, 0
      %p101 = por %p99, %p100
      %s103 = sadd.s32 %s102, 1
      %p106 = scmp.eq.s32.totalorder %s31, 1
      %p107 = scmp.ne.s32.totalorder %s102, %s104
      %p108 = scmp.eq.s32.totalorder %s31, 0
      %p109 = por %p107, %p108
      %p110 = scmp.ne.s32.totalorder %s102, %s104
      %p111 = scmp.eq.s32.totalorder %s36, 1
      %p112 = por %p110, %p111
      %p113 = scmp.ne.s32.totalorder %s104, %s105
      %p114 = scmp.eq.s32.totalorder %s36, 0
      %p115 = por %p113, %p114
      %p116 = scmp.ne.s32.totalorder %s104, %s105
      %p117 = scmp.eq.s32.totalorder %s37, 1
      %p118 = por %p116, %p117
      %p120 = scmp.ne.s32.totalorder %s105, %s119
      %p121 = scmp.eq.s32.totalorder %s37, 0
      %p122 = por %p120, %p121
      %s123 = ssub.s32 %s31, %s38
      %p124 = scmp.eq.s32.totalorder %s123, 0
      %s126 = sadd.s32 %s125, 1
      %s127 = scalar_select %p124, %s125, %s126
      %p130 = pneg %p124
      %p131 = scmp.eq.s32.totalorder %s31, 1
      %p132 = por %p130, %p131
      %p133 = scmp.ne.s32.totalorder %s125, %s128
      %p134 = scmp.eq.s32.totalorder %s31, 0
      %p135 = por %p133, %p134
      %p136 = scmp.ne.s32.totalorder %s125, %s128
      %p137 = scmp.eq.s32.totalorder %s36, 1
      %p138 = por %p136, %p137
      %p139 = scmp.ne.s32.totalorder %s128, %s129
      %p140 = scmp.eq.s32.totalorder %s36, 0
      %p141 = por %p139, %p140
      %p142 = scmp.ne.s32.totalorder %s128, %s129
      %p143 = scmp.eq.s32.totalorder %s37, 1
      %p144 = por %p142, %p143
      %p146 = scmp.ne.s32.totalorder %s129, %s145
      %p147 = scmp.eq.s32.totalorder %s37, 0
      %p148 = por %p146, %p147
      %s149 = ssub.s32 %s31, %s38
      %p150 = scmp.eq.s32.totalorder %s149, 0
      %s152 = sadd.s32 %s151, 1
      %s153 = scalar_select %p150, %s151, %s152
      %p156 = pneg %p150
      %p157 = scmp.eq.s32.totalorder %s31, 1
      %p158 = por %p156, %p157
      %p159 = scmp.ne.s32.totalorder %s151, %s154
      %p160 = scmp.eq.s32.totalorder %s31, 0
      %p161 = por %p159, %p160
      %p162 = scmp.ne.s32.totalorder %s151, %s154
      %p163 = scmp.eq.s32.totalorder %s36, 1
      %p164 = por %p162, %p163
      %p165 = scmp.ne.s32.totalorder %s154, %s155
      %p166 = scmp.eq.s32.totalorder %s36, 0
      %p167 = por %p165, %p166
      %p168 = scmp.ne.s32.totalorder %s154, %s155
      %p169 = scmp.eq.s32.totalorder %s37, 1
      %p170 = por %p168, %p169
      %p172 = scmp.ne.s32.totalorder %s155, %s171
      %p173 = scmp.eq.s32.totalorder %s37, 0
      %p174 = por %p172, %p173
      %s175 = ssub.s32 %s31, %s38
      %p176 = scmp.eq.s32.totalorder %s175, 0
      %s178 = sadd.s32 %s177, 1
      %s179 = scalar_select %p176, %s177, %s178
      %p182 = pneg %p176
      %p183 = scmp.eq.s32.totalorder %s31, 1
      %p184 = por %p182, %p183
      %p185 = scmp.ne.s32.totalorder %s177, %s180
      %p186 = scmp.eq.s32.totalorder %s31, 0
      %p187 = por %p185, %p186
      %p188 = scmp.ne.s32.totalorder %s177, %s180
      %p189 = scmp.eq.s32.totalorder %s36, 1
      %p190 = por %p188, %p189
      %p191 = scmp.ne.s32.totalorder %s180, %s181
      %p192 = scmp.eq.s32.totalorder %s36, 0
      %p193 = por %p191, %p192
      %p194 = scmp.ne.s32.totalorder %s180, %s181
      %p195 = scmp.eq.s32.totalorder %s37, 1
      %p196 = por %p194, %p195
      %p198 = scmp.ne.s32.totalorder %s181, %s197
      %p199 = scmp.eq.s32.totalorder %s37, 0
      %p200 = por %p198, %p199
      %s201 = ssub.s32 %s31, %s38
      %p202 = scmp.eq.s32.totalorder %s201, 0
      %s204 = sadd.s32 %s203, 1
      %s205 = scalar_select %p202, %s203, %s204
      %p208 = pneg %p202
      %p209 = scmp.eq.s32.totalorder %s31, 1
      %p210 = por %p208, %p209
      %p211 = scmp.ne.s32.totalorder %s203, %s206
      %p212 = scmp.eq.s32.totalorder %s31, 0
      %p213 = por %p211, %p212
      %p214 = scmp.ne.s32.totalorder %s203, %s206
      %p215 = scmp.eq.s32.totalorder %s36, 1
      %p216 = por %p214, %p215
      %p217 = scmp.ne.s32.totalorder %s206, %s207
      %p218 = scmp.eq.s32.totalorder %s36, 0
      %p219 = por %p217, %p218
      %p220 = scmp.ne.s32.totalorder %s206, %s207
      %p221 = scmp.eq.s32.totalorder %s37, 1
      %p222 = por %p220, %p221
      %p224 = scmp.ne.s32.totalorder %s207, %s223
      %p225 = scmp.eq.s32.totalorder %s37, 0
      %p226 = por %p224, %p225
      %s227 = ssub.s32 %s31, %s38
      %p228 = scmp.eq.s32.totalorder %s227, 0
      %s230 = sadd.s32 %s229, 1
      %s231 = scalar_select %p228, %s229, %s230
      %p234 = pneg %p228
      %p235 = scmp.eq.s32.totalorder %s31, 1
      %p236 = por %p234, %p235
      %p237 = scmp.ne.s32.totalorder %s229, %s232
      %p238 = scmp.eq.s32.totalorder %s31, 0
      %p239 = por %p237, %p238
      %p240 = scmp.ne.s32.totalorder %s229, %s232
      %p241 = scmp.eq.s32.totalorder %s36, 1
      %p242 = por %p240, %p241
      %p243 = scmp.ne.s32.totalorder %s232, %s233
      %p244 = scmp.eq.s32.totalorder %s36, 0
      %p245 = por %p243, %p244
      %p246 = scmp.ne.s32.totalorder %s232, %s233
      %p247 = scmp.eq.s32.totalorder %s37, 1
      %p248 = por %p246, %p247
      %p250 = scmp.ne.s32.totalorder %s233, %s249
      %p251 = scmp.eq.s32.totalorder %s37, 0
      %p252 = por %p250, %p251
      %s253 = ssub.s32 %s31, %s38
      %p254 = scmp.eq.s32.totalorder %s253, 0
      %s256 = sadd.s32 %s255, 1
      %s257 = scalar_select %p254, %s255, %s256
      %p260 = pneg %p254
      %p261 = scmp.eq.s32.totalorder %s31, 1
      %p262 = por %p260, %p261
      %p263 = scmp.ne.s32.totalorder %s255, %s258
      %p264 = scmp.eq.s32.totalorder %s31, 0
      %p265 = por %p263, %p264
      %p266 = scmp.ne.s32.totalorder %s255, %s258
      %p267 = scmp.eq.s32.totalorder %s36, 1
      %p268 = por %p266, %p267
      %p269 = scmp.ne.s32.totalorder %s258, %s259
      %p270 = scmp.eq.s32.totalorder %s36, 0
      %p271 = por %p269, %p270
      %p272 = scmp.ne.s32.totalorder %s258, %s259
      %p273 = scmp.eq.s32.totalorder %s37, 1
      %p274 = por %p272, %p273
      %p276 = scmp.ne.s32.totalorder %s259, %s275
      %p277 = scmp.eq.s32.totalorder %s37, 0
      %p278 = por %p276, %p277
      %s279 = ssub.s32 %s31, %s38
      %p280 = scmp.eq.s32.totalorder %s279, 0
      %s282 = sadd.s32 %s281, 1
      %s283 = scalar_select %p280, %s281, %s282
      %p286 = pneg %p280
      %p287 = scmp.eq.s32.totalorder %s31, 1
      %p288 = por %p286, %p287
      %p289 = scmp.ne.s32.totalorder %s281, %s284
      %p290 = scmp.eq.s32.totalorder %s31, 0
      %p291 = por %p289, %p290
      %p292 = scmp.ne.s32.totalorder %s281, %s284
      %p293 = scmp.eq.s32.totalorder %s36, 1
      %p294 = por %p292, %p293
      %p295 = scmp.ne.s32.totalorder %s284, %s285
      %p296 = scmp.eq.s32.totalorder %s36, 0
      %p297 = por %p295, %p296
      %p298 = scmp.ne.s32.totalorder %s284, %s285
      %p299 = scmp.eq.s32.totalorder %s37, 1
      %p300 = por %p298, %p299
      %p302 = scmp.ne.s32.totalorder %s285, %s301
      %p303 = scmp.eq.s32.totalorder %s37, 0
      %p304 = por %p302, %p303
      %s305 = ssub.s32 %s31, %s38
      %p306 = scmp.eq.s32.totalorder %s305, 0
      %s308 = sadd.s32 %s307, 1
      %s309 = scalar_select %p306, %s307, %s308
      %p312 = pneg %p306
      %p313 = scmp.eq.s32.totalorder %s31, 1
      %p314 = por %p312, %p313
      %p315 = scmp.ne.s32.totalorder %s307, %s310
      %p316 = scmp.eq.s32.totalorder %s31, 0
      %p317 = por %p315, %p316
      %p318 = scmp.ne.s32.totalorder %s307, %s310
      %p319 = scmp.eq.s32.totalorder %s36, 1
      %p320 = por %p318, %p319
      %p321 = scmp.ne.s32.totalorder %s310, %s311
      %p322 = scmp.eq.s32.totalorder %s36, 0
      %p323 = por %p321, %p322
      %p324 = scmp.ne.s32.totalorder %s310, %s311
      %p325 = scmp.eq.s32.totalorder %s37, 1
      %p326 = por %p324, %p325
      %p328 = scmp.ne.s32.totalorder %s311, %s327
      %p329 = scmp.eq.s32.totalorder %s37, 0
      %p330 = por %p328, %p329
      %s331 = ssub.s32 %s31, %s38
      %p332 = scmp.eq.s32.totalorder %s331, 0
      %s334 = sadd.s32 %s333, 1
      %s335 = scalar_select %p332, %s333, %s334
      %p338 = pneg %p332
      %p339 = scmp.eq.s32.totalorder %s31, 1
      %p340 = por %p338, %p339
      %p341 = scmp.ne.s32.totalorder %s333, %s336
      %p342 = scmp.eq.s32.totalorder %s31, 0
      %p343 = por %p341, %p342
      %p344 = scmp.ne.s32.totalorder %s333, %s336
      %p345 = scmp.eq.s32.totalorder %s36, 1
      %p346 = por %p344, %p345
      %p347 = scmp.ne.s32.totalorder %s336, %s337
      %p348 = scmp.eq.s32.totalorder %s36, 0
      %p349 = por %p347, %p348
      %p350 = scmp.ne.s32.totalorder %s336, %s337
      %p351 = scmp.eq.s32.totalorder %s37, 1
      %p352 = por %p350, %p351
      %p354 = scmp.ne.s32.totalorder %s337, %s353
      %p355 = scmp.eq.s32.totalorder %s37, 0
      %p356 = por %p354, %p355
      %s357 = ssub.s32 %s31, %s38
      %p358 = scmp.eq.s32.totalorder %s357, 0
      %s360 = sadd.s32 %s359, 1
      %s361 = scalar_select %p358, %s359, %s360
      %p364 = pneg %p358
      %p365 = scmp.eq.s32.totalorder %s31, 1
      %p366 = por %p364, %p365
      %p367 = scmp.ne.s32.totalorder %s359, %s362
      %p368 = scmp.eq.s32.totalorder %s31, 0
      %p369 = por %p367, %p368
      %p370 = scmp.ne.s32.totalorder %s359, %s362
      %p371 = scmp.eq.s32.totalorder %s36, 1
      %p372 = por %p370, %p371
      %p373 = scmp.ne.s32.totalorder %s362, %s363
      %p374 = scmp.eq.s32.totalorder %s36, 0
      %p375 = por %p373, %p374
      %p376 = scmp.ne.s32.totalorder %s362, %s363
      %p377 = scmp.eq.s32.totalorder %s37, 1
      %p378 = por %p376, %p377
      %p380 = scmp.ne.s32.totalorder %s363, %s379
      %p381 = scmp.eq.s32.totalorder %s37, 0
      %p382 = por %p380, %p381
      %s383 = ssub.s32 %s31, %s38
      %p384 = scmp.eq.s32.totalorder %s383, 0
      %s386 = sadd.s32 %s385, 1
      %s387 = scalar_select %p384, %s385, %s386
      %p390 = pneg %p384
      %p391 = scmp.eq.s32.totalorder %s31, 1
      %p392 = por %p390, %p391
      %p393 = scmp.ne.s32.totalorder %s385, %s388
      %p394 = scmp.eq.s32.totalorder %s31, 0
      %p395 = por %p393, %p394
      %p396 = scmp.ne.s32.totalorder %s385, %s388
      %p397 = scmp.eq.s32.totalorder %s36, 1
      %p398 = por %p396, %p397
      %p399 = scmp.ne.s32.totalorder %s388, %s389
      %p400 = scmp.eq.s32.totalorder %s36, 0
      %p401 = por %p399, %p400
      %p402 = scmp.ne.s32.totalorder %s388, %s389
      %p403 = scmp.eq.s32.totalorder %s37, 1
      %p404 = por %p402, %p403
      %p406 = scmp.ne.s32.totalorder %s389, %s405
      %p407 = scmp.eq.s32.totalorder %s37, 0
      %p408 = por %p406, %p407
      %s409 = ssub.s32 %s31, %s38
      %p410 = scmp.eq.s32.totalorder %s409, 0
      %s412 = sadd.s32 %s411, 1
      %s413 = scalar_select %p410, %s411, %s412
      %p416 = pneg %p410
      %p417 = scmp.eq.s32.totalorder %s31, 1
      %p418 = por %p416, %p417
      %p419 = scmp.ne.s32.totalorder %s411, %s414
      %p420 = scmp.eq.s32.totalorder %s31, 0
      %p421 = por %p419, %p420
      %p422 = scmp.ne.s32.totalorder %s411, %s414
      %p423 = scmp.eq.s32.totalorder %s36, 1
      %p424 = por %p422, %p423
      %p425 = scmp.ne.s32.totalorder %s414, %s415
      %p426 = scmp.eq.s32.totalorder %s36, 0
      %p427 = por %p425, %p426
      %p428 = scmp.ne.s32.totalorder %s414, %s415
      %p429 = scmp.eq.s32.totalorder %s37, 1
      %p430 = por %p428, %p429
      %p432 = scmp.ne.s32.totalorder %s415, %s431
      %p433 = scmp.eq.s32.totalorder %s37, 0
      %p434 = por %p432, %p433
      %s436 = sadd.s32 %s435, 1
      %p439 = scmp.eq.s32.totalorder %s31, 1
      %p440 = scmp.ne.s32.totalorder %s435, %s437
      %p441 = scmp.eq.s32.totalorder %s31, 0
      %p442 = por %p440, %p441
      %p443 = scmp.ne.s32.totalorder %s435, %s437
      %p444 = scmp.eq.s32.totalorder %s36, 1
      %p445 = por %p443, %p444
      %p446 = scmp.ne.s32.totalorder %s437, %s438
      %p447 = scmp.eq.s32.totalorder %s36, 0
      %p448 = por %p446, %p447
      %p449 = scmp.ne.s32.totalorder %s437, %s438
      %p450 = scmp.eq.s32.totalorder %s37, 1
      %p451 = por %p449, %p450
      %p453 = scmp.ne.s32.totalorder %s438, %s452
      %p454 = scmp.eq.s32.totalorder %s37, 0
      %p455 = por %p453, %p454
      %s457 = sadd.s32 %s456, 1
      %p460 = scmp.eq.s32.totalorder %s31, 1
      %p461 = scmp.ne.s32.totalorder %s456, %s458
      %p462 = scmp.eq.s32.totalorder %s31, 0
      %p463 = por %p461, %p462
      %p464 = scmp.ne.s32.totalorder %s456, %s458
      %p465 = scmp.eq.s32.totalorder %s36, 1
      %p466 = por %p464, %p465
      %p467 = scmp.ne.s32.totalorder %s458, %s459
      %p468 = scmp.eq.s32.totalorder %s36, 0
      %p469 = por %p467, %p468
      %p470 = scmp.ne.s32.totalorder %s458, %s459
      %p471 = scmp.eq.s32.totalorder %s37, 1
      %p472 = por %p470, %p471
      %p474 = scmp.ne.s32.totalorder %s459, %s473
      %p475 = scmp.eq.s32.totalorder %s37, 0
      %p476 = por %p474, %p475
      %s478 = sadd.s32 %s477, 1
      %p481 = scmp.eq.s32.totalorder %s31, 1
      %p482 = scmp.ne.s32.totalorder %s477, %s479
      %p483 = scmp.eq.s32.totalorder %s31, 0
      %p484 = por %p482, %p483
      %p485 = scmp.ne.s32.totalorder %s477, %s479
      %p486 = scmp.eq.s32.totalorder %s36, 1
      %p487 = por %p485, %p486
      %p488 = scmp.ne.s32.totalorder %s479, %s480
      %p489 = scmp.eq.s32.totalorder %s36, 0
      %p490 = por %p488, %p489
      %p491 = scmp.ne.s32.totalorder %s479, %s480
      %p492 = scmp.eq.s32.totalorder %s37, 1
      %p493 = por %p491, %p492
      %p495 = scmp.ne.s32.totalorder %s480, %s494
      %p496 = scmp.eq.s32.totalorder %s37, 0
      %p497 = por %p495, %p496
      %p498 = scmp.le.s32.totalorder 1, %s31
      %p499 = scmp.lt.s32.totalorder %s31, 3
      %p500 = pnand %p498, %p499
      %p501 = pneg %p500
      // Predicated region
      $region9: #{distilbert_transfer_forward.1} parent=5 // pred_check
        _
      $region10: #{distilbert_transfer_forward.1} parent=5 // pred_check_branch
        %503 = sbr.rel (%p500) target = $region12
      $region11: #{distilbert_transfer_forward.1} parent=5 // pred_region
        %s504 = ssub.s32 %s31, 1
        // Predicated region
        $region13: #{distilbert_transfer_forward.1} parent=11 // pred_check
          %p505 = pneg %p52
        $region14: #{distilbert_transfer_forward.1} parent=11 // pred_check_branch
          %507 = sbr.rel (%p505) target = $region16
        $region15: #{distilbert_transfer_forward.1} parent=11 // pred_region
          _
        $region16: #{distilbert_transfer_forward.1} parent=11 // pred_fallthru
          _
        // Predicated region
        $region17: #{distilbert_transfer_forward.1} parent=11 // pred_check
          %p508 = pneg %p73
        $region18: #{distilbert_transfer_forward.1} parent=11 // pred_check_branch
          %510 = sbr.rel (%p508) target = $region20
        $region19: #{distilbert_transfer_forward.1} parent=11 // pred_region
          _
        $region20: #{distilbert_transfer_forward.1} parent=11 // pred_fallthru
          _
        // Predicated region
        $region21: #{distilbert_transfer_forward.1} parent=11 // pred_check
          %p511 = pneg %p94
        $region22: #{distilbert_transfer_forward.1} parent=11 // pred_check_branch
          %513 = sbr.rel (%p511) target = $region24
        $region23: #{distilbert_transfer_forward.1} parent=11 // pred_region
          _
        $region24: #{distilbert_transfer_forward.1} parent=11 // pred_fallthru
          _
        // Predicated region
        $region25: #{distilbert_transfer_forward.1} parent=11 // pred_check
          %p514 = pneg %p115
        $region26: #{distilbert_transfer_forward.1} parent=11 // pred_check_branch
          %516 = sbr.rel (%p514) target = $region28
        $region27: #{distilbert_transfer_forward.1} parent=11 // pred_region
          _
        $region28: #{distilbert_transfer_forward.1} parent=11 // pred_fallthru
          _
        // Predicated region
        $region29: #{distilbert_transfer_forward.1} parent=11 // pred_check
          %p517 = pneg %p448
        $region30: #{distilbert_transfer_forward.1} parent=11 // pred_check_branch
          %519 = sbr.rel (%p517) target = $region32
        $region31: #{distilbert_transfer_forward.1} parent=11 // pred_region
          _
        $region32: #{distilbert_transfer_forward.1} parent=11 // pred_fallthru
          _
        // Predicated region
        $region33: #{distilbert_transfer_forward.1} parent=11 // pred_check
          %p520 = pneg %p469
        $region34: #{distilbert_transfer_forward.1} parent=11 // pred_check_branch
          %522 = sbr.rel (%p520) target = $region36
        $region35: #{distilbert_transfer_forward.1} parent=11 // pred_region
          _
        $region36: #{distilbert_transfer_forward.1} parent=11 // pred_fallthru
          _
      $region12: #{distilbert_transfer_forward.1} parent=5 // pred_fallthru
        _
      %p523 = scmp.lt.s32.totalorder %s31, 2
      // Predicated region
      $region37: #{distilbert_transfer_forward.1} parent=5 // pred_check
        %p524 = pneg %p523
      $region38: #{distilbert_transfer_forward.1} parent=5 // pred_check_branch
        %526 = sbr.rel (%p524) target = $region40
      $region39: #{distilbert_transfer_forward.1} parent=5 // pred_region
        // Predicated region
        $region41: #{distilbert_transfer_forward.1} parent=39 // pred_check
          %p527 = pneg %p135
        $region42: #{distilbert_transfer_forward.1} parent=39 // pred_check_branch
          %529 = sbr.rel (%p527) target = $region44
        $region43: #{distilbert_transfer_forward.1} parent=39 // pred_region
          %s530 = sand.u32 %s125, 1
          %s531 = scalar_lea.sflag [#allocation5], %s530
          %s532 = sand.u32 %s125, 1
          %s533 = smul.addr %s532, 192
          %s534 = scalar_lea.vmem [#allocation4], %s533
          %536 = vsyncadd %s531, 0
          %s537 = smul.addr %s31, 48
          %s538 = smul.addr %s537, 4
          %s539 = scalar_lea.hbm %s4, %s538
          %s540 = sshll.u32 %s539, 4
          %s541 = int_to_ptr.hbm [resolvable:$true] %s540
          %s542 = sshll.u32 %s534, 4
          %s543 = int_to_ptr.vmem [resolvable:$true] %s542
          %548 = dma.hbm_to_vmem [thread:$0]  %s541, 3072, %s543, %s531, 192, 192, 12
        $region44: #{distilbert_transfer_forward.1} parent=39 // pred_fallthru
          _
        // Predicated region
        $region45: #{distilbert_transfer_forward.1} parent=39 // pred_check
          %p549 = pneg %p161
        $region46: #{distilbert_transfer_forward.1} parent=39 // pred_check_branch
          %551 = sbr.rel (%p549) target = $region48
        $region47: #{distilbert_transfer_forward.1} parent=39 // pred_region
          %p552 = scmp.lt.s32.totalorder %s31, 1
          %s553 = scalar_select %p552, %s31, 1
          %s554 = smul.addr %s553, 3
          %s555 = scalar_lea.vmem %s5, %s554
        $region48: #{distilbert_transfer_forward.1} parent=39 // pred_fallthru
          _
        // Predicated region
        $region49: #{distilbert_transfer_forward.1} parent=39 // pred_check
          %p556 = pneg %p187
        $region50: #{distilbert_transfer_forward.1} parent=39 // pred_check_branch
          %558 = sbr.rel (%p556) target = $region52
        $region51: #{distilbert_transfer_forward.1} parent=39 // pred_region
          %p559 = scmp.lt.s32.totalorder %s31, 1
          %s560 = scalar_select %p559, %s31, 1
          %s561 = smul.addr %s560, 16
          %s562 = smul.addr %s561, 4
          %s563 = scalar_lea.vmem %s6, %s562
        $region52: #{distilbert_transfer_forward.1} parent=39 // pred_fallthru
          _
        // Predicated region
        $region53: #{distilbert_transfer_forward.1} parent=39 // pred_check
          %p564 = pneg %p213
        $region54: #{distilbert_transfer_forward.1} parent=39 // pred_check_branch
          %566 = sbr.rel (%p564) target = $region56
        $region55: #{distilbert_transfer_forward.1} parent=39 // pred_region
          %p567 = scmp.lt.s32.totalorder %s31, 1
          %s568 = scalar_select %p567, %s31, 1
          %s569 = scalar_lea.vmem %s7, %s568
        $region56: #{distilbert_transfer_forward.1} parent=39 // pred_fallthru
          _
        // Predicated region
        $region57: #{distilbert_transfer_forward.1} parent=39 // pred_check
          %p570 = pneg %p239
        $region58: #{distilbert_transfer_forward.1} parent=39 // pred_check_branch
          %572 = sbr.rel (%p570) target = $region60
        $region59: #{distilbert_transfer_forward.1} parent=39 // pred_region
          %p573 = scmp.lt.s32.totalorder %s31, 1
          %s574 = scalar_select %p573, %s31, 1
          %s575 = scalar_lea.vmem %s8, %s574
        $region60: #{distilbert_transfer_forward.1} parent=39 // pred_fallthru
          _
        // Predicated region
        $region61: #{distilbert_transfer_forward.1} parent=39 // pred_check
          %p576 = pneg %p265
        $region62: #{distilbert_transfer_forward.1} parent=39 // pred_check_branch
          %578 = sbr.rel (%p576) target = $region64
        $region63: #{distilbert_transfer_forward.1} parent=39 // pred_region
          %p579 = scmp.lt.s32.totalorder %s31, 1
          %s580 = scalar_select %p579, %s31, 1
          %s581 = scalar_lea.vmem %s9, %s580
        $region64: #{distilbert_transfer_forward.1} parent=39 // pred_fallthru
          _
        // Predicated region
        $region65: #{distilbert_transfer_forward.1} parent=39 // pred_check
          %p582 = pneg %p291
        $region66: #{distilbert_transfer_forward.1} parent=39 // pred_check_branch
          %584 = sbr.rel (%p582) target = $region68
        $region67: #{distilbert_transfer_forward.1} parent=39 // pred_region
          %p585 = scmp.lt.s32.totalorder %s31, 1
          %s586 = scalar_select %p585, %s31, 1
          %s587 = smul.addr %s586, 32
          %s588 = smul.addr %s587, 4
          %s589 = scalar_lea.vmem %s10, %s588
        $region68: #{distilbert_transfer_forward.1} parent=39 // pred_fallthru
          _
        // Predicated region
        $region69: #{distilbert_transfer_forward.1} parent=39 // pred_check
          %p590 = pneg %p317
        $region70: #{distilbert_transfer_forward.1} parent=39 // pred_check_branch
          %592 = sbr.rel (%p590) target = $region72
        $region71: #{distilbert_transfer_forward.1} parent=39 // pred_region
          %p593 = scmp.lt.s32.totalorder %s31, 1
          %s594 = scalar_select %p593, %s31, 1
          %s595 = smul.addr %s594, 2
          %s596 = scalar_lea.vmem %s11, %s595
        $region72: #{distilbert_transfer_forward.1} parent=39 // pred_fallthru
          _
        // Predicated region
        $region73: #{distilbert_transfer_forward.1} parent=39 // pred_check
          %p597 = pneg %p343
        $region74: #{distilbert_transfer_forward.1} parent=39 // pred_check_branch
          %599 = sbr.rel (%p597) target = $region76
        $region75: #{distilbert_transfer_forward.1} parent=39 // pred_region
          %s600 = sand.u32 %s333, 1
          %s601 = scalar_lea.sflag [#allocation8], %s600
          %s602 = sand.u32 %s333, 1
          %s603 = smul.addr %s602, 128
          %s604 = scalar_lea.vmem [#allocation7], %s603
          %606 = vsyncadd %s601, 0
          %s607 = smul.addr %s31, 32
          %s608 = smul.addr %s607, 4
          %s609 = scalar_lea.hbm %s12, %s608
          %s610 = sshll.u32 %s609, 4
          %s611 = int_to_ptr.hbm [resolvable:$true] %s610
          %s612 = sshll.u32 %s604, 4
          %s613 = int_to_ptr.vmem [resolvable:$true] %s612
          %618 = dma.hbm_to_vmem [thread:$0]  %s611, 2048, %s613, %s601, 64, 64, 4
        $region76: #{distilbert_transfer_forward.1} parent=39 // pred_fallthru
          _
        // Predicated region
        $region77: #{distilbert_transfer_forward.1} parent=39 // pred_check
          %p619 = pneg %p369
        $region78: #{distilbert_transfer_forward.1} parent=39 // pred_check_branch
          %621 = sbr.rel (%p619) target = $region80
        $region79: #{distilbert_transfer_forward.1} parent=39 // pred_region
          %p622 = scmp.lt.s32.totalorder %s31, 1
          %s623 = scalar_select %p622, %s31, 1
          %s624 = scalar_lea.vmem %s13, %s623
        $region80: #{distilbert_transfer_forward.1} parent=39 // pred_fallthru
          _
        // Predicated region
        $region81: #{distilbert_transfer_forward.1} parent=39 // pred_check
          %p625 = pneg %p395
        $region82: #{distilbert_transfer_forward.1} parent=39 // pred_check_branch
          %627 = sbr.rel (%p625) target = $region84
        $region83: #{distilbert_transfer_forward.1} parent=39 // pred_region
          %p628 = scmp.lt.s32.totalorder %s31, 1
          %s629 = scalar_select %p628, %s31, 1
          %s630 = scalar_lea.vmem %s14, %s629
        $region84: #{distilbert_transfer_forward.1} parent=39 // pred_fallthru
          _
        // Predicated region
        $region85: #{distilbert_transfer_forward.1} parent=39 // pred_check
          %p631 = pneg %p421
        $region86: #{distilbert_transfer_forward.1} parent=39 // pred_check_branch
          %633 = sbr.rel (%p631) target = $region88
        $region87: #{distilbert_transfer_forward.1} parent=39 // pred_region
          %p634 = scmp.lt.s32.totalorder %s31, 1
          %s635 = scalar_select %p634, %s31, 1
          %s636 = scalar_lea.vmem %s15, %s635
        $region88: #{distilbert_transfer_forward.1} parent=39 // pred_fallthru
          _
      $region40: #{distilbert_transfer_forward.1} parent=5 // pred_fallthru
        _
      %p637 = scmp.le.s32.totalorder 1, %s31
      %p638 = scmp.lt.s32.totalorder %s31, 3
      %p639 = pnand %p637, %p638
      %p640 = pneg %p639
      // Predicated region
      $region89: #{distilbert_transfer_forward.1} parent=5 // pred_check
        _
      $region90: #{distilbert_transfer_forward.1} parent=5 // pred_check_branch
        %642 = sbr.rel (%p639) target = $region92
      $region91: #{distilbert_transfer_forward.1} parent=5 // pred_region
        %s643 = ssub.s32 %s31, 1
        %s644 = sand.u32 %s128, 1
        %s645 = scalar_lea.sflag [#allocation5], %s644
        %s646 = sand.u32 %s128, 1
        %s647 = smul.addr %s646, 192
        %s648 = scalar_lea.vmem [#allocation4], %s647
        // Predicated region
        $region93: #{distilbert_transfer_forward.1} parent=91 // pred_check
          %p649 = pneg %p141
        $region94: #{distilbert_transfer_forward.1} parent=91 // pred_check_branch
          %651 = sbr.rel (%p649) target = $region96
        $region95: #{distilbert_transfer_forward.1} parent=91 // pred_region
          %653 = dma.done %s645, 3072
        $region96: #{distilbert_transfer_forward.1} parent=91 // pred_fallthru
          _
        %s654 = sand.u32 %s336, 1
        %s655 = scalar_lea.sflag [#allocation8], %s654
        %s656 = sand.u32 %s336, 1
        %s657 = smul.addr %s656, 128
        %s658 = scalar_lea.vmem [#allocation7], %s657
        // Predicated region
        $region97: #{distilbert_transfer_forward.1} parent=91 // pred_check
          %p659 = pneg %p349
        $region98: #{distilbert_transfer_forward.1} parent=91 // pred_check_branch
          %661 = sbr.rel (%p659) target = $region100
        $region99: #{distilbert_transfer_forward.1} parent=91 // pred_region
          %663 = dma.done %s655, 2048
        $region100: #{distilbert_transfer_forward.1} parent=91 // pred_fallthru
          _
        %p664 = pneg %p52
        %p665 = pneg %p49
        %p666 = pneg %p73
        %p667 = pneg %p70
        %p668 = pneg %p94
        %p669 = pneg %p91
        %p670 = pneg %p115
        %p671 = pneg %p112
        %s672 = sand.u32 %s128, 1
        %s673 = scalar_lea.sflag [#allocation5], %s672
        %s674 = sand.u32 %s128, 1
        %s675 = smul.addr %s674, 192
        %s676 = scalar_lea.vmem [#allocation4], %s675
        %p677 = pneg %p141
        %p678 = pneg %p138
        %p679 = scmp.lt.s32.totalorder %s36, 1
        %s680 = scalar_select %p679, %s36, 1
        %s681 = smul.addr %s680, 3
        %s682 = scalar_lea.vmem %s5, %s681
        %p683 = pneg %p167
        %p684 = pneg %p164
        %p685 = scmp.lt.s32.totalorder %s36, 1
        %s686 = scalar_select %p685, %s36, 1
        %s687 = smul.addr %s686, 16
        %s688 = smul.addr %s687, 4
        %s689 = scalar_lea.vmem %s6, %s688
        %p690 = pneg %p193
        %p691 = pneg %p190
        %p692 = scmp.lt.s32.totalorder %s36, 1
        %s693 = scalar_select %p692, %s36, 1
        %s694 = scalar_lea.vmem %s7, %s693
        %p695 = pneg %p219
        %p696 = pneg %p216
        %p697 = scmp.lt.s32.totalorder %s36, 1
        %s698 = scalar_select %p697, %s36, 1
        %s699 = scalar_lea.vmem %s8, %s698
        %p700 = pneg %p245
        %p701 = pneg %p242
        %p702 = scmp.lt.s32.totalorder %s36, 1
        %s703 = scalar_select %p702, %s36, 1
        %s704 = scalar_lea.vmem %s9, %s703
        %p705 = pneg %p271
        %p706 = pneg %p268
        %p707 = scmp.lt.s32.totalorder %s36, 1
        %s708 = scalar_select %p707, %s36, 1
        %s709 = smul.addr %s708, 32
        %s710 = smul.addr %s709, 4
        %s711 = scalar_lea.vmem %s10, %s710
        %p712 = pneg %p297
        %p713 = pneg %p294
        %p714 = scmp.lt.s32.totalorder %s36, 1
        %s715 = scalar_select %p714, %s36, 1
        %s716 = smul.addr %s715, 2
        %s717 = scalar_lea.vmem %s11, %s716
        %p718 = pneg %p323
        %p719 = pneg %p320
        %s720 = sand.u32 %s336, 1
        %s721 = scalar_lea.sflag [#allocation8], %s720
        %s722 = sand.u32 %s336, 1
        %s723 = smul.addr %s722, 128
        %s724 = scalar_lea.vmem [#allocation7], %s723
        %p725 = pneg %p349
        %p726 = pneg %p346
        %p727 = scmp.lt.s32.totalorder %s36, 1
        %s728 = scalar_select %p727, %s36, 1
        %s729 = scalar_lea.vmem %s13, %s728
        %p730 = pneg %p375
        %p731 = pneg %p372
        %p732 = scmp.lt.s32.totalorder %s36, 1
        %s733 = scalar_select %p732, %s36, 1
        %s734 = scalar_lea.vmem %s14, %s733
        %p735 = pneg %p401
        %p736 = pneg %p398
        %p737 = scmp.lt.s32.totalorder %s36, 1
        %s738 = scalar_select %p737, %s36, 1
        %s739 = scalar_lea.vmem %s15, %s738
        %p740 = pneg %p427
        %p741 = pneg %p424
        %p742 = pneg %p448
        %p743 = pneg %p445
        %p744 = pneg %p469
        %p745 = pneg %p466
        %p746 = pneg %p490
        %p747 = pneg %p487
        %p748 = scmp.lt.s32.totalorder %s36, 1
        %s749 = scalar_select %p748, %s36, 1
        %s750 = smul.addr %s749, 3
        %s751 = scalar_lea.vmem %s5, %s750
        %p752 = scmp.lt.s32.totalorder %s36, 1
        %s753 = scalar_select %p752, %s36, 1
        %s754 = smul.addr %s753, 16
        %s755 = smul.addr %s754, 4
        %s756 = scalar_lea.vmem %s6, %s755
        %p757 = scmp.lt.s32.totalorder %s36, 1
        %s758 = scalar_select %p757, %s36, 1
        %s759 = scalar_lea.vmem %s7, %s758
        %p760 = scmp.lt.s32.totalorder %s36, 1
        %s761 = scalar_select %p760, %s36, 1
        %s762 = scalar_lea.vmem %s8, %s761
        %p763 = scmp.lt.s32.totalorder %s36, 1
        %s764 = scalar_select %p763, %s36, 1
        %s765 = scalar_lea.vmem %s9, %s764
        %p766 = scmp.lt.s32.totalorder %s36, 1
        %s767 = scalar_select %p766, %s36, 1
        %s768 = smul.addr %s767, 32
        %s769 = smul.addr %s768, 4
        %s770 = scalar_lea.vmem %s10, %s769
        %p771 = scmp.lt.s32.totalorder %s36, 1
        %s772 = scalar_select %p771, %s36, 1
        %s773 = smul.addr %s772, 2
        %s774 = scalar_lea.vmem %s11, %s773
        %p775 = scmp.lt.s32.totalorder %s36, 1
        %s776 = scalar_select %p775, %s36, 1
        %s777 = scalar_lea.vmem %s13, %s776
        %p778 = scmp.lt.s32.totalorder %s36, 1
        %s779 = scalar_select %p778, %s36, 1
        %s780 = scalar_lea.vmem %s14, %s779
        %p781 = scmp.lt.s32.totalorder %s36, 1
        %s782 = scalar_select %p781, %s36, 1
        %s783 = scalar_lea.vmem %s15, %s782
        %p785 = scmp.eq.s32.totalorder %s36, 0
        // Predicated region
        $region101: #{distilbert_transfer_forward.1} parent=91 // pred_check
          %p786 = pneg %p785
        $region102: #{distilbert_transfer_forward.1} parent=91 // pred_check_branch
          %788 = sbr.rel (%p786) target = $region104
        $region103: #{distilbert_transfer_forward.1} parent=91 // pred_region
          %v789 = vld [vmem:[%s0] sm:$0xf]
          %v790 = vld [vmem:[%s0 + $0x4] sm:$0xf]
          %v791 = vunpack.c.l.bf16 %v789
          %v792 = vunpack.c.l.bf16 %v790
          %v793 = vld [vmem:[%s2] sm:$0x1]
          %v794 = vld [vmem:[%s3] sm:$0x1]
          %795 = vadd.xlane.f32.xlu0 %v791
          %v796 = vpop.xlane.xlu0 %795
          %797 = vadd.xlane.f32.xlu0 %v792
          %v798 = vpop.xlane.xlu0 %797
          %v799 = vrcp.pop 128.0
          %v800 = vmul.f32 128.0, %v799
          %v801 = vsub.f32 1.0, %v800
          %v802 = vmul.f32 %v799, %v801
          %v803 = vadd.f32 %v799, %v802
          %vm804 = vweird.f32 %v799
          %v805 = vsel %vm804, %v799, %v803
          %v806 = vmul.f32 %v796, %v805
          %v807 = vmul.f32 %v798, %v805
          %v808 = vsub.f32 %v791, %v806
          %v809 = vsub.f32 %v792, %v807
          %v810 = vmul.f32 %v808, %v808
          %v811 = vmul.f32 %v809, %v809
          %812 = vadd.xlane.f32.xlu0 %v810
          %v813 = vpop.xlane.xlu0 %812
          %814 = vadd.xlane.f32.xlu0 %v811
          %v815 = vpop.xlane.xlu0 %814
          %v816 = vmul.f32 %v813, %v805
          %v817 = vmul.f32 %v815, %v805
          %v818 = vadd.f32 %v816, 1e-12
          %v819 = vadd.f32 %v817, 1e-12
          %v820 = vrsqrt.pop %v818
          %v821 = vmul.f32 %v820, %v818
          %v822 = vmul.f32 %v821, %v820
          %v823 = vmul.f32 0.5, %v822
          %v824 = vsub.f32 1.5, %v823
          %v825 = vmul.f32 %v820, %v824
          %vm826 = vweird.f32 %v818
          %vm827 = vweird.f32 %v820
          %vm828 = vmor %vm826, %vm827
          %v829 = vsel %vm828, %v820, %v825
          %v830 = vrsqrt.pop %v819
          %v831 = vmul.f32 %v830, %v819
          %v832 = vmul.f32 %v831, %v830
          %v833 = vmul.f32 0.5, %v832
          %v834 = vsub.f32 1.5, %v833
          %v835 = vmul.f32 %v830, %v834
          %vm836 = vweird.f32 %v819
          %vm837 = vweird.f32 %v830
          %vm838 = vmor %vm836, %vm837
          %v839 = vsel %vm838, %v830, %v835
          %v840 = vmul.f32 %v808, %v829
          %v841 = vmul.f32 %v809, %v839
          %v843 = vperm.slane %v793, 0
          %v845 = vmul.f32 %v840, %v843
          %v846 = vmul.f32 %v841, %v843
          %v848 = vperm.slane %v794, 0
          %v850 = vadd.f32 %v845, %v848
          %v851 = vadd.f32 %v846, %v848
          %852 = vst [vmem:[#allocation2] sm:$0xff] %v850
          %853 = vst [vmem:[#allocation2 + $0x8] sm:$0xff] %v851
        $region104: #{distilbert_transfer_forward.1} parent=91 // pred_fallthru
          _
        %v854 = vld [vmem:[#allocation2] sm:$0xff]
        %v855 = vld [vmem:[#allocation2 + $0x8] sm:$0xff]
        %v856 = vld [vmem:[%s1] sm:$0xff]
        %v857 = vld [vmem:[%s1 + $0x8] sm:$0xff]
        %v858 = vld [vmem:[%s648] sm:$0xff]
        %v859 = vld [vmem:[%s648 + $0x8] sm:$0xf]
        %v860 = vld [vmem:[%s648 + $0xc] sm:$0xff]
        %v861 = vld [vmem:[%s648 + $0x14] sm:$0xf]
        %v862 = vld [vmem:[%s648 + $0x18] sm:$0xff]
        %v863 = vld [vmem:[%s648 + $0x20] sm:$0xf]
        %v864 = vld [vmem:[%s648 + $0x24] sm:$0xff]
        %v865 = vld [vmem:[%s648 + $0x2c] sm:$0xf]
        %v866 = vld [vmem:[%s648 + $0x30] sm:$0xff]
        %v867 = vld [vmem:[%s648 + $0x38] sm:$0xf]
        %v868 = vld [vmem:[%s648 + $0x3c] sm:$0xff]
        %v869 = vld [vmem:[%s648 + $0x44] sm:$0xf]
        %v870 = vld [vmem:[%s648 + $0x48] sm:$0xff]
        %v871 = vld [vmem:[%s648 + $0x50] sm:$0xf]
        %v872 = vld [vmem:[%s648 + $0x54] sm:$0xff]
        %v873 = vld [vmem:[%s648 + $0x5c] sm:$0xf]
        %v874 = vld [vmem:[%s648 + $0x60] sm:$0xff]
        %v875 = vld [vmem:[%s648 + $0x68] sm:$0xf]
        %v876 = vld [vmem:[%s648 + $0x6c] sm:$0xff]
        %v877 = vld [vmem:[%s648 + $0x74] sm:$0xf]
        %v878 = vld [vmem:[%s648 + $0x78] sm:$0xff]
        %v879 = vld [vmem:[%s648 + $0x80] sm:$0xf]
        %v880 = vld [vmem:[%s648 + $0x84] sm:$0xff]
        %v881 = vld [vmem:[%s648 + $0x8c] sm:$0xf]
        %v882 = vld [vmem:[%s648 + $0x90] sm:$0xff]
        %v883 = vld [vmem:[%s648 + $0x98] sm:$0xf]
        %v884 = vld [vmem:[%s648 + $0x9c] sm:$0xff]
        %v885 = vld [vmem:[%s648 + $0xa4] sm:$0xf]
        %v886 = vld [vmem:[%s648 + $0xa8] sm:$0xff]
        %v887 = vld [vmem:[%s648 + $0xb0] sm:$0xf]
        %v888 = vld [vmem:[%s648 + $0xb4] sm:$0xff]
        %v889 = vld [vmem:[%s648 + $0xbc] sm:$0xf]
        %v890 = vpack.c.bf16 %v855, %v854
        %v891 = vld [vmem:[%s751] sm:$0x7]
        %v893 = vperm.slane %v891, 0
        %v894 = vperm.slane %v891, 1
        %v895 = vperm.slane %v891, 2
        %v931 = vunpack.c.l.b16 %v858
        %v932 = vunpack.c.h.b16 %v858
        %v933 = vunpack.c.l.b16 %v859
        %v934 = vunpack.c.l.b16 %v860
        %v935 = vunpack.c.h.b16 %v860
        %v936 = vunpack.c.l.b16 %v861
        %v937 = vunpack.c.l.b16 %v862
        %v938 = vunpack.c.h.b16 %v862
        %v939 = vunpack.c.l.b16 %v863
        %v940 = vunpack.c.l.b16 %v864
        %v941 = vunpack.c.h.b16 %v864
        %v942 = vunpack.c.l.b16 %v865
        %v943 = vunpack.c.l.b16 %v866
        %v944 = vunpack.c.h.b16 %v866
        %v945 = vunpack.c.l.b16 %v867
        %v946 = vunpack.c.l.b16 %v868
        %v947 = vunpack.c.h.b16 %v868
        %v948 = vunpack.c.l.b16 %v869
        %v949 = vunpack.c.l.b16 %v870
        %v950 = vunpack.c.h.b16 %v870
        %v951 = vunpack.c.l.b16 %v871
        %v952 = vunpack.c.l.b16 %v872
        %v953 = vunpack.c.h.b16 %v872
        %v954 = vunpack.c.l.b16 %v873
        %v955 = vunpack.c.l.b16 %v874
        %v956 = vunpack.c.h.b16 %v874
        %v957 = vunpack.c.l.b16 %v875
        %v958 = vunpack.c.l.b16 %v876
        %v959 = vunpack.c.h.b16 %v876
        %v960 = vunpack.c.l.b16 %v877
        %v961 = vunpack.c.l.b16 %v878
        %v962 = vunpack.c.h.b16 %v878
        %v963 = vunpack.c.l.b16 %v879
        %v964 = vunpack.c.l.b16 %v880
        %v965 = vunpack.c.h.b16 %v880
        %v966 = vunpack.c.l.b16 %v881
        %v967 = vunpack.c.l.b16 %v882
        %v968 = vunpack.c.h.b16 %v882
        %v969 = vunpack.c.l.b16 %v883
        %v970 = vunpack.c.l.b16 %v884
        %v971 = vunpack.c.h.b16 %v884
        %v972 = vunpack.c.l.b16 %v885
        %v973 = vunpack.c.l.b16 %v886
        %v974 = vunpack.c.h.b16 %v886
        %v975 = vunpack.c.l.b16 %v887
        %v976 = vunpack.c.l.b16 %v888
        %v977 = vunpack.c.h.b16 %v888
        %v978 = vunpack.c.l.b16 %v889
        %v979 = vpack.c.b16 %v934, %v931
        %v980 = vpack.c.b16 %v935, %v932
        %v981 = vpack.c.b16 %v936, %v933
        %v982 = vpack.c.b16 %v940, %v937
        %v983 = vpack.c.b16 %v941, %v938
        %v984 = vpack.c.b16 %v942, %v939
        %v985 = vpack.c.b16 %v946, %v943
        %v986 = vpack.c.b16 %v947, %v944
        %v987 = vpack.c.b16 %v948, %v945
        %v988 = vpack.c.b16 %v952, %v949
        %v989 = vpack.c.b16 %v953, %v950
        %v990 = vpack.c.b16 %v954, %v951
        %v991 = vpack.c.b16 %v958, %v955
        %v992 = vpack.c.b16 %v959, %v956
        %v993 = vpack.c.b16 %v960, %v957
        %v994 = vpack.c.b16 %v964, %v961
        %v995 = vpack.c.b16 %v965, %v962
        %v996 = vpack.c.b16 %v966, %v963
        %v997 = vpack.c.b16 %v970, %v967
        %v998 = vpack.c.b16 %v971, %v968
        %v999 = vpack.c.b16 %v972, %v969
        %v1000 = vpack.c.b16 %v976, %v973
        %v1001 = vpack.c.b16 %v977, %v974
        %v1002 = vpack.c.b16 %v978, %v975
        %1027 = vmatpush.bf16.msra.mxu0 %v1000
        %1028 = vmatpush.bf16.msra.mxu0 %v997
        %1029 = vmatpush.bf16.msra.mxu0 %v994
        %1030 = vmatpush.bf16.msra.mxu0 %v991
        %1031 = vmatpush.bf16.msra.mxu0 %v988
        %1032 = vmatpush.bf16.msra.mxu0 %v985
        %1033 = vmatpush.bf16.msra.mxu0 %v982
        %1034 = vmatpush.bf16.msra.mxu0 %v979
        %1035 = vmatmul.bf16.gmra.mxu0 %v890
        %v1036 = vpop.f32.mrf.mxu0
        %v1037 = vadd.f32 %v893, %v1036
        %v1038 = vpop.f32.mrf.mxu0
        %v1039 = vadd.f32 %v893, %v1038
        %1040 = vdwg.mxu0
        %1041 = vmatpush.bf16.msra.mxu0 %v1001
        %1042 = vmatpush.bf16.msra.mxu0 %v998
        %1043 = vmatpush.bf16.msra.mxu0 %v995
        %1044 = vmatpush.bf16.msra.mxu0 %v992
        %1045 = vmatpush.bf16.msra.mxu0 %v989
        %1046 = vmatpush.bf16.msra.mxu0 %v986
        %1047 = vmatpush.bf16.msra.mxu0 %v983
        %1048 = vmatpush.bf16.msra.mxu0 %v980
        %1049 = vmatmul.bf16.gmra.mxu0 %v890
        %v1050 = vpop.f32.mrf.mxu0
        %v1051 = vadd.f32 %v894, %v1050
        %v1052 = vpop.f32.mrf.mxu0
        %v1053 = vadd.f32 %v894, %v1052
        %1054 = vdwg.mxu0
        %1055 = vmatpush.bf16.msra.mxu0 %v1002
        %1056 = vmatpush.bf16.msra.mxu0 %v999
        %1057 = vmatpush.bf16.msra.mxu0 %v996
        %1058 = vmatpush.bf16.msra.mxu0 %v993
        %1059 = vmatpush.bf16.msra.mxu0 %v990
        %1060 = vmatpush.bf16.msra.mxu0 %v987
        %1061 = vmatpush.bf16.msra.mxu0 %v984
        %1062 = vmatpush.bf16.msra.mxu0 %v981
        %1063 = vmatmul.bf16.gmra.mxu0 %v890
        %v1064 = vpop.f32.mrf.mxu0
        %v1065 = vadd.f32 %v895, %v1064
        %v1066 = vpop.f32.mrf.mxu0
        %v1067 = vadd.f32 %v895, %v1066
        %1068 = vdwg.mxu0
        %v1069 = vpack.c.bf16 %v1039, %v1037
        %v1070 = vpack.c.bf16 %v1053, %v1051
        %v1071 = vpack.c.bf16 %v1067, %v1065
        %vm1072 = vcmask 523264
        %v1074 = vsel %vm1072, %v1069, 0
        %v1077 = vsel %vm1072, %v1070, 0
        %1079 = vmatpush.bf16.xpose.msra.mxu0 0
        %1080 = vmatpush.bf16.xpose.msra.mxu0 0
        %1081 = vmatpush.bf16.xpose.msra.mxu0 0
        %1082 = vmatpush.bf16.xpose.msra.mxu0 0
        %1083 = vmatpush.bf16.xpose.msra.mxu0 0
        %1084 = vmatpush.bf16.xpose.msra.mxu0 0
        %1085 = vmatpush.bf16.xpose.msra.mxu0 0
        %1086 = vmatpush.bf16.xpose.msra.mxu0 %v1077
        %1087 = vmatmul.bf16.gmra.mxu0 %v1074
        %v1088 = vpop.f32.mrf.mxu0
        %v1089 = vadd.f32 0.0, %v1088
        %v1090 = vpop.f32.mrf.mxu0
        %v1091 = vadd.f32 0.0, %v1090
        %1092 = vdwg.mxu0
        %v1093 = vmul.f32 %v1089, 0.125
        %v1094 = vmul.f32 %v1091, 0.125
        %v1095 = vadd.f32 %v1093, %v856
        %v1096 = vadd.f32 %v1094, %v857
        %vm1097 = vcmask 130048
        %v1098 = vsel %vm1097, %v1095, -inf
        %1099 = vmax.xlane.f32.xlu0 %v1098
        %v1100 = vpop.xlane.xlu0 %1099
        %v1101 = vsel %vm1097, %v1096, -inf
        %1102 = vmax.xlane.f32.xlu0 %v1101
        %v1103 = vpop.xlane.xlu0 %1102
        %v1104 = vsub.f32 %v1095, %v1100
        %v1105 = vsub.f32 %v1096, %v1103
        %v1106 = vmul.f32 %v1104, 1.442695
        %v1107 = vpow.pop %v1106
        %v1108 = vmul.f32 %v1105, 1.442695
        %v1109 = vpow.pop %v1108
        %v1110 = vsel %vm1097, %v1107, 0.0
        %1111 = vadd.xlane.f32.xlu0 %v1110
        %v1112 = vpop.xlane.xlu0 %1111
        %v1113 = vsel %vm1097, %v1109, 0.0
        %1114 = vadd.xlane.f32.xlu0 %v1113
        %v1115 = vpop.xlane.xlu0 %1114
        %v1116 = vrcp.pop %v1112
        %v1117 = vrcp.pop %v1115
        %v1118 = vmul.f32 %v1107, %v1116
        %v1119 = vmul.f32 %v1109, %v1117
        %v1120 = vpack.c.bf16 %v1119, %v1118
        %v1122 = vsel %vm1097, %v1120, 0
        %1124 = vmatpush.bf16.msra.mxu0 0
        %1125 = vmatpush.bf16.msra.mxu0 0
        %1126 = vmatpush.bf16.msra.mxu0 0
        %1127 = vmatpush.bf16.msra.mxu0 0
        %1128 = vmatpush.bf16.msra.mxu0 0
        %1129 = vmatpush.bf16.msra.mxu0 0
        %1130 = vmatpush.bf16.msra.mxu0 0
        %1131 = vmatpush.bf16.msra.mxu0 %v1071
        %1132 = vmatmul.bf16.gmra.mxu0 %v1122
        %v1133 = vpop.f32.mrf.mxu0
        %v1134 = vadd.f32 0.0, %v1133
        %v1135 = vpop.f32.mrf.mxu0
        %v1136 = vadd.f32 0.0, %v1135
        %1137 = vdwg.mxu0
        %1138 = vst.msk [vmem:[#allocation3] sm:$0xff] %vm1072, %v1134
        %1139 = vst.msk [vmem:[#allocation3 + $0x8] sm:$0xff] %vm1072, %v1136
        %1141 = vrot.lane.b32.xlu0 %v1069, 64
        %v1142 = vpop.permute.xlu0 %1141
        %1144 = vrot.lane.b32.xlu0 %v1070, 64
        %v1145 = vpop.permute.xlu0 %1144
        %v1147 = vsel %vm1072, %v1142, 0
        %v1150 = vsel %vm1072, %v1145, 0
        %1152 = vmatpush.bf16.xpose.msra.mxu0 0
        %1153 = vmatpush.bf16.xpose.msra.mxu0 0
        %1154 = vmatpush.bf16.xpose.msra.mxu0 0
        %1155 = vmatpush.bf16.xpose.msra.mxu0 0
        %1156 = vmatpush.bf16.xpose.msra.mxu0 0
        %1157 = vmatpush.bf16.xpose.msra.mxu0 0
        %1158 = vmatpush.bf16.xpose.msra.mxu0 0
        %1159 = vmatpush.bf16.xpose.msra.mxu0 %v1150
        %1160 = vmatmul.bf16.gmra.mxu0 %v1147
        %v1161 = vpop.f32.mrf.mxu0
        %v1162 = vadd.f32 0.0, %v1161
        %v1163 = vpop.f32.mrf.mxu0
        %v1164 = vadd.f32 0.0, %v1163
        %1165 = vdwg.mxu0
        %v1166 = vmul.f32 %v1162, 0.125
        %v1167 = vmul.f32 %v1164, 0.125
        %v1168 = vadd.f32 %v1166, %v856
        %v1169 = vadd.f32 %v1167, %v857
        %v1170 = vsel %vm1097, %v1168, -inf
        %1171 = vmax.xlane.f32.xlu0 %v1170
        %v1172 = vpop.xlane.xlu0 %1171
        %v1173 = vsel %vm1097, %v1169, -inf
        %1174 = vmax.xlane.f32.xlu0 %v1173
        %v1175 = vpop.xlane.xlu0 %1174
        %v1176 = vsub.f32 %v1168, %v1172
        %v1177 = vsub.f32 %v1169, %v1175
        %v1178 = vmul.f32 %v1176, 1.442695
        %v1179 = vpow.pop %v1178
        %v1180 = vmul.f32 %v1177, 1.442695
        %v1181 = vpow.pop %v1180
        %v1182 = vsel %vm1097, %v1179, 0.0
        %1183 = vadd.xlane.f32.xlu0 %v1182
        %v1184 = vpop.xlane.xlu0 %1183
        %v1185 = vsel %vm1097, %v1181, 0.0
        %1186 = vadd.xlane.f32.xlu0 %v1185
        %v1187 = vpop.xlane.xlu0 %1186
        %v1188 = vrcp.pop %v1184
        %v1189 = vrcp.pop %v1187
        %v1190 = vmul.f32 %v1179, %v1188
        %v1191 = vmul.f32 %v1181, %v1189
        %v1192 = vpack.c.bf16 %v1191, %v1190
        %1194 = vrot.lane.b32.xlu0 %v1071, 64
        %v1195 = vpop.permute.xlu0 %1194
        %v1198 = vsel %vm1097, %v1192, 0
        %1200 = vmatpush.bf16.msra.mxu0 0
        %1201 = vmatpush.bf16.msra.mxu0 0
        %1202 = vmatpush.bf16.msra.mxu0 0
        %1203 = vmatpush.bf16.msra.mxu0 0
        %1204 = vmatpush.bf16.msra.mxu0 0
        %1205 = vmatpush.bf16.msra.mxu0 0
        %1206 = vmatpush.bf16.msra.mxu0 0
        %1207 = vmatpush.bf16.msra.mxu0 %v1195
        %1208 = vmatmul.bf16.gmra.mxu0 %v1198
        %v1209 = vpop.f32.mrf.mxu0
        %v1210 = vadd.f32 0.0, %v1209
        %v1211 = vpop.f32.mrf.mxu0
        %v1212 = vadd.f32 0.0, %v1211
        %1213 = vdwg.mxu0
        %1216 = vrot.lane.b32.xlu0 %v1210, 64
        %v1217 = vpop.permute.xlu0 %1216
        %1218 = vrot.lane.b32.xlu0 %v1212, 64
        %v1219 = vpop.permute.xlu0 %1218
        %vm1222 = vcmask 1048064
        %1223 = vst.msk [vmem:[#allocation3] sm:$0xff] %vm1222, %v1217
        %1224 = vst.msk [vmem:[#allocation3 + $0x8] sm:$0xff] %vm1222, %v1219
        %v1225 = vld [vmem:[#allocation3] sm:$0xff]
        %v1226 = vld [vmem:[#allocation3 + $0x8] sm:$0xff]
        %v1227 = vld [vmem:[%s756] sm:$0xf]
        %v1228 = vld [vmem:[%s756 + $0x4] sm:$0xf]
        %v1229 = vld [vmem:[%s756 + $0x8] sm:$0xf]
        %v1230 = vld [vmem:[%s756 + $0xc] sm:$0xf]
        %v1231 = vld [vmem:[%s756 + $0x10] sm:$0xf]
        %v1232 = vld [vmem:[%s756 + $0x14] sm:$0xf]
        %v1233 = vld [vmem:[%s756 + $0x18] sm:$0xf]
        %v1234 = vld [vmem:[%s756 + $0x1c] sm:$0xf]
        %v1235 = vld [vmem:[%s756 + $0x20] sm:$0xf]
        %v1236 = vld [vmem:[%s756 + $0x24] sm:$0xf]
        %v1237 = vld [vmem:[%s756 + $0x28] sm:$0xf]
        %v1238 = vld [vmem:[%s756 + $0x2c] sm:$0xf]
        %v1239 = vld [vmem:[%s756 + $0x30] sm:$0xf]
        %v1240 = vld [vmem:[%s756 + $0x34] sm:$0xf]
        %v1241 = vld [vmem:[%s756 + $0x38] sm:$0xf]
        %v1242 = vld [vmem:[%s756 + $0x3c] sm:$0xf]
        %v1243 = vpack.c.bf16 %v1226, %v1225
        %v1244 = vld [vmem:[%s759] sm:$0x1]
        %v1246 = vperm.slane %v1244, 0
        %v1264 = vunpack.c.l.b16 %v1227
        %v1265 = vunpack.c.l.b16 %v1228
        %v1266 = vunpack.c.l.b16 %v1229
        %v1267 = vunpack.c.l.b16 %v1230
        %v1268 = vunpack.c.l.b16 %v1231
        %v1269 = vunpack.c.l.b16 %v1232
        %v1270 = vunpack.c.l.b16 %v1233
        %v1271 = vunpack.c.l.b16 %v1234
        %v1272 = vunpack.c.l.b16 %v1235
        %v1273 = vunpack.c.l.b16 %v1236
        %v1274 = vunpack.c.l.b16 %v1237
        %v1275 = vunpack.c.l.b16 %v1238
        %v1276 = vunpack.c.l.b16 %v1239
        %v1277 = vunpack.c.l.b16 %v1240
        %v1278 = vunpack.c.l.b16 %v1241
        %v1279 = vunpack.c.l.b16 %v1242
        %v1280 = vpack.c.b16 %v1265, %v1264
        %v1281 = vpack.c.b16 %v1267, %v1266
        %v1282 = vpack.c.b16 %v1269, %v1268
        %v1283 = vpack.c.b16 %v1271, %v1270
        %v1284 = vpack.c.b16 %v1273, %v1272
        %v1285 = vpack.c.b16 %v1275, %v1274
        %v1286 = vpack.c.b16 %v1277, %v1276
        %v1287 = vpack.c.b16 %v1279, %v1278
        %1296 = vmatpush.bf16.msra.mxu0 %v1287
        %1297 = vmatpush.bf16.msra.mxu0 %v1286
        %1298 = vmatpush.bf16.msra.mxu0 %v1285
        %1299 = vmatpush.bf16.msra.mxu0 %v1284
        %1300 = vmatpush.bf16.msra.mxu0 %v1283
        %1301 = vmatpush.bf16.msra.mxu0 %v1282
        %1302 = vmatpush.bf16.msra.mxu0 %v1281
        %1303 = vmatpush.bf16.msra.mxu0 %v1280
        %1304 = vmatmul.bf16.gmra.mxu0 %v1243
        %v1305 = vpop.f32.mrf.mxu0
        %v1306 = vadd.f32 %v1246, %v1305
        %v1307 = vpop.f32.mrf.mxu0
        %v1308 = vadd.f32 %v1246, %v1307
        %1309 = vdwg.mxu0
        %v1310 = vadd.f32 %v1306, %v854
        %v1311 = vadd.f32 %v1308, %v855
        %v1312 = vld [vmem:[%s762] sm:$0x1]
        %v1313 = vld [vmem:[%s765] sm:$0x1]
        %1314 = vadd.xlane.f32.xlu0 %v1310
        %v1315 = vpop.xlane.xlu0 %1314
        %1316 = vadd.xlane.f32.xlu0 %v1311
        %v1317 = vpop.xlane.xlu0 %1316
        %v1318 = vrcp.pop 128.0
        %v1319 = vmul.f32 128.0, %v1318
        %v1320 = vsub.f32 1.0, %v1319
        %v1321 = vmul.f32 %v1318, %v1320
        %v1322 = vadd.f32 %v1318, %v1321
        %vm1323 = vweird.f32 %v1318
        %v1324 = vsel %vm1323, %v1318, %v1322
        %v1325 = vmul.f32 %v1315, %v1324
        %v1326 = vmul.f32 %v1317, %v1324
        %v1327 = vsub.f32 %v1310, %v1325
        %v1328 = vsub.f32 %v1311, %v1326
        %v1329 = vmul.f32 %v1327, %v1327
        %v1330 = vmul.f32 %v1328, %v1328
        %1331 = vadd.xlane.f32.xlu0 %v1329
        %v1332 = vpop.xlane.xlu0 %1331
        %1333 = vadd.xlane.f32.xlu0 %v1330
        %v1334 = vpop.xlane.xlu0 %1333
        %v1335 = vmul.f32 %v1332, %v1324
        %v1336 = vmul.f32 %v1334, %v1324
        %v1337 = vadd.f32 %v1335, 1e-12
        %v1338 = vadd.f32 %v1336, 1e-12
        %v1339 = vrsqrt.pop %v1337
        %v1340 = vmul.f32 %v1339, %v1337
        %v1341 = vmul.f32 %v1340, %v1339
        %v1342 = vmul.f32 0.5, %v1341
        %v1343 = vsub.f32 1.5, %v1342
        %v1344 = vmul.f32 %v1339, %v1343
        %vm1345 = vweird.f32 %v1337
        %vm1346 = vweird.f32 %v1339
        %vm1347 = vmor %vm1345, %vm1346
        %v1348 = vsel %vm1347, %v1339, %v1344
        %v1349 = vrsqrt.pop %v1338
        %v1350 = vmul.f32 %v1349, %v1338
        %v1351 = vmul.f32 %v1350, %v1349
        %v1352 = vmul.f32 0.5, %v1351
        %v1353 = vsub.f32 1.5, %v1352
        %v1354 = vmul.f32 %v1349, %v1353
        %vm1355 = vweird.f32 %v1338
        %vm1356 = vweird.f32 %v1349
        %vm1357 = vmor %vm1355, %vm1356
        %v1358 = vsel %vm1357, %v1349, %v1354
        %v1359 = vmul.f32 %v1327, %v1348
        %v1360 = vmul.f32 %v1328, %v1358
        %v1362 = vperm.slane %v1312, 0
        %v1364 = vmul.f32 %v1359, %v1362
        %v1365 = vmul.f32 %v1360, %v1362
        %v1367 = vperm.slane %v1313, 0
        %v1369 = vadd.f32 %v1364, %v1367
        %v1370 = vadd.f32 %v1365, %v1367
        %v1371 = vld [vmem:[%s770] sm:$0xff]
        %v1372 = vld [vmem:[%s770 + $0x8] sm:$0xff]
        %v1373 = vld [vmem:[%s770 + $0x10] sm:$0xff]
        %v1374 = vld [vmem:[%s770 + $0x18] sm:$0xff]
        %v1375 = vld [vmem:[%s770 + $0x20] sm:$0xff]
        %v1376 = vld [vmem:[%s770 + $0x28] sm:$0xff]
        %v1377 = vld [vmem:[%s770 + $0x30] sm:$0xff]
        %v1378 = vld [vmem:[%s770 + $0x38] sm:$0xff]
        %v1379 = vld [vmem:[%s770 + $0x40] sm:$0xff]
        %v1380 = vld [vmem:[%s770 + $0x48] sm:$0xff]
        %v1381 = vld [vmem:[%s770 + $0x50] sm:$0xff]
        %v1382 = vld [vmem:[%s770 + $0x58] sm:$0xff]
        %v1383 = vld [vmem:[%s770 + $0x60] sm:$0xff]
        %v1384 = vld [vmem:[%s770 + $0x68] sm:$0xff]
        %v1385 = vld [vmem:[%s770 + $0x70] sm:$0xff]
        %v1386 = vld [vmem:[%s770 + $0x78] sm:$0xff]
        %v1387 = vpack.c.bf16 %v1370, %v1369
        %v1388 = vld [vmem:[%s774] sm:$0x3]
        %v1390 = vperm.slane %v1388, 0
        %v1391 = vperm.slane %v1388, 1
        %v1410 = vunpack.c.l.b16 %v1371
        %v1411 = vunpack.c.h.b16 %v1371
        %v1412 = vunpack.c.l.b16 %v1372
        %v1413 = vunpack.c.h.b16 %v1372
        %v1414 = vunpack.c.l.b16 %v1373
        %v1415 = vunpack.c.h.b16 %v1373
        %v1416 = vunpack.c.l.b16 %v1374
        %v1417 = vunpack.c.h.b16 %v1374
        %v1418 = vunpack.c.l.b16 %v1375
        %v1419 = vunpack.c.h.b16 %v1375
        %v1420 = vunpack.c.l.b16 %v1376
        %v1421 = vunpack.c.h.b16 %v1376
        %v1422 = vunpack.c.l.b16 %v1377
        %v1423 = vunpack.c.h.b16 %v1377
        %v1424 = vunpack.c.l.b16 %v1378
        %v1425 = vunpack.c.h.b16 %v1378
        %v1426 = vunpack.c.l.b16 %v1379
        %v1427 = vunpack.c.h.b16 %v1379
        %v1428 = vunpack.c.l.b16 %v1380
        %v1429 = vunpack.c.h.b16 %v1380
        %v1430 = vunpack.c.l.b16 %v1381
        %v1431 = vunpack.c.h.b16 %v1381
        %v1432 = vunpack.c.l.b16 %v1382
        %v1433 = vunpack.c.h.b16 %v1382
        %v1434 = vunpack.c.l.b16 %v1383
        %v1435 = vunpack.c.h.b16 %v1383
        %v1436 = vunpack.c.l.b16 %v1384
        %v1437 = vunpack.c.h.b16 %v1384
        %v1438 = vunpack.c.l.b16 %v1385
        %v1439 = vunpack.c.h.b16 %v1385
        %v1440 = vunpack.c.l.b16 %v1386
        %v1441 = vunpack.c.h.b16 %v1386
        %v1442 = vpack.c.b16 %v1412, %v1410
        %v1443 = vpack.c.b16 %v1413, %v1411
        %v1444 = vpack.c.b16 %v1416, %v1414
        %v1445 = vpack.c.b16 %v1417, %v1415
        %v1446 = vpack.c.b16 %v1420, %v1418
        %v1447 = vpack.c.b16 %v1421, %v1419
        %v1448 = vpack.c.b16 %v1424, %v1422
        %v1449 = vpack.c.b16 %v1425, %v1423
        %v1450 = vpack.c.b16 %v1428, %v1426
        %v1451 = vpack.c.b16 %v1429, %v1427
        %v1452 = vpack.c.b16 %v1432, %v1430
        %v1453 = vpack.c.b16 %v1433, %v1431
        %v1454 = vpack.c.b16 %v1436, %v1434
        %v1455 = vpack.c.b16 %v1437, %v1435
        %v1456 = vpack.c.b16 %v1440, %v1438
        %v1457 = vpack.c.b16 %v1441, %v1439
        %1474 = vmatpush.bf16.msra.mxu0 %v1456
        %1475 = vmatpush.bf16.msra.mxu0 %v1454
        %1476 = vmatpush.bf16.msra.mxu0 %v1452
        %1477 = vmatpush.bf16.msra.mxu0 %v1450
        %1478 = vmatpush.bf16.msra.mxu0 %v1448
        %1479 = vmatpush.bf16.msra.mxu0 %v1446
        %1480 = vmatpush.bf16.msra.mxu0 %v1444
        %1481 = vmatpush.bf16.msra.mxu0 %v1442
        %1482 = vmatmul.bf16.gmra.mxu0 %v1387
        %v1483 = vpop.f32.mrf.mxu0
        %v1484 = vadd.f32 %v1390, %v1483
        %v1485 = vpop.f32.mrf.mxu0
        %v1486 = vadd.f32 %v1390, %v1485
        %1487 = vdwg.mxu0
        %1488 = vmatpush.bf16.msra.mxu0 %v1457
        %1489 = vmatpush.bf16.msra.mxu0 %v1455
        %1490 = vmatpush.bf16.msra.mxu0 %v1453
        %1491 = vmatpush.bf16.msra.mxu0 %v1451
        %1492 = vmatpush.bf16.msra.mxu0 %v1449
        %1493 = vmatpush.bf16.msra.mxu0 %v1447
        %1494 = vmatpush.bf16.msra.mxu0 %v1445
        %1495 = vmatpush.bf16.msra.mxu0 %v1443
        %1496 = vmatmul.bf16.gmra.mxu0 %v1387
        %v1497 = vpop.f32.mrf.mxu0
        %v1498 = vadd.f32 %v1391, %v1497
        %v1499 = vpop.f32.mrf.mxu0
        %v1500 = vadd.f32 %v1391, %v1499
        %1501 = vdwg.mxu0
        %v1502 = vmul.f32 %v1484, %v1484
        %v1503 = vmul.f32 %v1498, %v1498
        %v1504 = vmul.f32 %v1486, %v1486
        %v1505 = vmul.f32 %v1500, %v1500
        %v1506 = vmul.f32 %v1484, %v1502
        %v1507 = vmul.f32 %v1498, %v1503
        %v1508 = vmul.f32 %v1486, %v1504
        %v1509 = vmul.f32 %v1500, %v1505
        %v1510 = vmul.f32 %v1506, 0.044715
        %v1511 = vmul.f32 %v1507, 0.044715
        %v1512 = vmul.f32 %v1508, 0.044715
        %v1513 = vmul.f32 %v1509, 0.044715
        %v1514 = vadd.f32 %v1484, %v1510
        %v1515 = vadd.f32 %v1498, %v1511
        %v1516 = vadd.f32 %v1486, %v1512
        %v1517 = vadd.f32 %v1500, %v1513
        %v1518 = vmul.f32 %v1514, 0.7978846
        %v1519 = vmul.f32 %v1515, 0.7978846
        %v1520 = vmul.f32 %v1516, 0.7978846
        %v1521 = vmul.f32 %v1517, 0.7978846
        %v1522 = vtanh.pop %v1518
        %v1523 = vtanh.pop %v1519
        %v1524 = vtanh.pop %v1520
        %v1525 = vtanh.pop %v1521
        %v1526 = vadd.f32 %v1522, 1.0
        %v1527 = vadd.f32 %v1523, 1.0
        %v1528 = vadd.f32 %v1524, 1.0
        %v1529 = vadd.f32 %v1525, 1.0
        %v1530 = vmul.f32 %v1526, 0.5
        %v1531 = vmul.f32 %v1527, 0.5
        %v1532 = vmul.f32 %v1528, 0.5
        %v1533 = vmul.f32 %v1529, 0.5
        %v1534 = vmul.f32 %v1484, %v1530
        %v1535 = vmul.f32 %v1498, %v1531
        %v1536 = vmul.f32 %v1486, %v1532
        %v1537 = vmul.f32 %v1500, %v1533
        %v1538 = vld [vmem:[%s658] sm:$0xf]
        %v1539 = vld [vmem:[%s658 + $0x4] sm:$0xf]
        %v1540 = vld [vmem:[%s658 + $0x8] sm:$0xf]
        %v1541 = vld [vmem:[%s658 + $0xc] sm:$0xf]
        %v1542 = vld [vmem:[%s658 + $0x10] sm:$0xf]
        %v1543 = vld [vmem:[%s658 + $0x14] sm:$0xf]
        %v1544 = vld [vmem:[%s658 + $0x18] sm:$0xf]
        %v1545 = vld [vmem:[%s658 + $0x1c] sm:$0xf]
        %v1546 = vld [vmem:[%s658 + $0x20] sm:$0xf]
        %v1547 = vld [vmem:[%s658 + $0x24] sm:$0xf]
        %v1548 = vld [vmem:[%s658 + $0x28] sm:$0xf]
        %v1549 = vld [vmem:[%s658 + $0x2c] sm:$0xf]
        %v1550 = vld [vmem:[%s658 + $0x30] sm:$0xf]
        %v1551 = vld [vmem:[%s658 + $0x34] sm:$0xf]
        %v1552 = vld [vmem:[%s658 + $0x38] sm:$0xf]
        %v1553 = vld [vmem:[%s658 + $0x3c] sm:$0xf]
        %v1554 = vld [vmem:[%s658 + $0x40] sm:$0xf]
        %v1555 = vld [vmem:[%s658 + $0x44] sm:$0xf]
        %v1556 = vld [vmem:[%s658 + $0x48] sm:$0xf]
        %v1557 = vld [vmem:[%s658 + $0x4c] sm:$0xf]
        %v1558 = vld [vmem:[%s658 + $0x50] sm:$0xf]
        %v1559 = vld [vmem:[%s658 + $0x54] sm:$0xf]
        %v1560 = vld [vmem:[%s658 + $0x58] sm:$0xf]
        %v1561 = vld [vmem:[%s658 + $0x5c] sm:$0xf]
        %v1562 = vld [vmem:[%s658 + $0x60] sm:$0xf]
        %v1563 = vld [vmem:[%s658 + $0x64] sm:$0xf]
        %v1564 = vld [vmem:[%s658 + $0x68] sm:$0xf]
        %v1565 = vld [vmem:[%s658 + $0x6c] sm:$0xf]
        %v1566 = vld [vmem:[%s658 + $0x70] sm:$0xf]
        %v1567 = vld [vmem:[%s658 + $0x74] sm:$0xf]
        %v1568 = vld [vmem:[%s658 + $0x78] sm:$0xf]
        %v1569 = vld [vmem:[%s658 + $0x7c] sm:$0xf]
        %v1570 = vpack.c.bf16 %v1536, %v1534
        %v1571 = vpack.c.bf16 %v1537, %v1535
        %v1572 = vld [vmem:[%s777] sm:$0x1]
        %v1574 = vperm.slane %v1572, 0
        %v1608 = vunpack.c.l.b16 %v1538
        %v1609 = vunpack.c.l.b16 %v1539
        %v1610 = vunpack.c.l.b16 %v1540
        %v1611 = vunpack.c.l.b16 %v1541
        %v1612 = vunpack.c.l.b16 %v1542
        %v1613 = vunpack.c.l.b16 %v1543
        %v1614 = vunpack.c.l.b16 %v1544
        %v1615 = vunpack.c.l.b16 %v1545
        %v1616 = vunpack.c.l.b16 %v1546
        %v1617 = vunpack.c.l.b16 %v1547
        %v1618 = vunpack.c.l.b16 %v1548
        %v1619 = vunpack.c.l.b16 %v1549
        %v1620 = vunpack.c.l.b16 %v1550
        %v1621 = vunpack.c.l.b16 %v1551
        %v1622 = vunpack.c.l.b16 %v1552
        %v1623 = vunpack.c.l.b16 %v1553
        %v1624 = vunpack.c.l.b16 %v1554
        %v1625 = vunpack.c.l.b16 %v1555
        %v1626 = vunpack.c.l.b16 %v1556
        %v1627 = vunpack.c.l.b16 %v1557
        %v1628 = vunpack.c.l.b16 %v1558
        %v1629 = vunpack.c.l.b16 %v1559
        %v1630 = vunpack.c.l.b16 %v1560
        %v1631 = vunpack.c.l.b16 %v1561
        %v1632 = vunpack.c.l.b16 %v1562
        %v1633 = vunpack.c.l.b16 %v1563
        %v1634 = vunpack.c.l.b16 %v1564
        %v1635 = vunpack.c.l.b16 %v1565
        %v1636 = vunpack.c.l.b16 %v1566
        %v1637 = vunpack.c.l.b16 %v1567
        %v1638 = vunpack.c.l.b16 %v1568
        %v1639 = vunpack.c.l.b16 %v1569
        %v1640 = vpack.c.b16 %v1609, %v1608
        %v1641 = vpack.c.b16 %v1611, %v1610
        %v1642 = vpack.c.b16 %v1613, %v1612
        %v1643 = vpack.c.b16 %v1615, %v1614
        %v1644 = vpack.c.b16 %v1617, %v1616
        %v1645 = vpack.c.b16 %v1619, %v1618
        %v1646 = vpack.c.b16 %v1621, %v1620
        %v1647 = vpack.c.b16 %v1623, %v1622
        %v1648 = vpack.c.b16 %v1625, %v1624
        %v1649 = vpack.c.b16 %v1627, %v1626
        %v1650 = vpack.c.b16 %v1629, %v1628
        %v1651 = vpack.c.b16 %v1631, %v1630
        %v1652 = vpack.c.b16 %v1633, %v1632
        %v1653 = vpack.c.b16 %v1635, %v1634
        %v1654 = vpack.c.b16 %v1637, %v1636
        %v1655 = vpack.c.b16 %v1639, %v1638
        %1672 = vmatpush.bf16.msra.mxu0 %v1647
        %1673 = vmatpush.bf16.msra.mxu0 %v1646
        %1674 = vmatpush.bf16.msra.mxu0 %v1645
        %1675 = vmatpush.bf16.msra.mxu0 %v1644
        %1676 = vmatpush.bf16.msra.mxu0 %v1643
        %1677 = vmatpush.bf16.msra.mxu0 %v1642
        %1678 = vmatpush.bf16.msra.mxu0 %v1641
        %1679 = vmatpush.bf16.msra.mxu0 %v1640
        %1680 = vmatmul.bf16.gmra.mxu0 %v1570
        %v1681 = vpop.f32.mrf.mxu0
        %v1682 = vadd.f32 %v1574, %v1681
        %v1683 = vpop.f32.mrf.mxu0
        %v1684 = vadd.f32 %v1574, %v1683
        %1685 = vdwg.mxu0
        %1686 = vmatpush.bf16.msra.mxu0 %v1655
        %1687 = vmatpush.bf16.msra.mxu0 %v1654
        %1688 = vmatpush.bf16.msra.mxu0 %v1653
        %1689 = vmatpush.bf16.msra.mxu0 %v1652
        %1690 = vmatpush.bf16.msra.mxu0 %v1651
        %1691 = vmatpush.bf16.msra.mxu0 %v1650
        %1692 = vmatpush.bf16.msra.mxu0 %v1649
        %1693 = vmatpush.bf16.msra.mxu0 %v1648
        %1694 = vmatmul.bf16.gmra.mxu0 %v1571
        %v1695 = vpop.f32.mrf.mxu0
        %v1696 = vadd.f32 %v1682, %v1695
        %v1697 = vpop.f32.mrf.mxu0
        %v1698 = vadd.f32 %v1684, %v1697
        %1699 = vdwg.mxu0
        %v1700 = vadd.f32 %v1696, %v1369
        %v1701 = vadd.f32 %v1698, %v1370
        %v1702 = vld [vmem:[%s780] sm:$0x1]
        %v1703 = vld [vmem:[%s783] sm:$0x1]
        %1704 = vadd.xlane.f32.xlu0 %v1700
        %v1705 = vpop.xlane.xlu0 %1704
        %1706 = vadd.xlane.f32.xlu0 %v1701
        %v1707 = vpop.xlane.xlu0 %1706
        %v1708 = vmul.f32 %v1705, %v1324
        %v1709 = vmul.f32 %v1707, %v1324
        %v1710 = vsub.f32 %v1700, %v1708
        %v1711 = vsub.f32 %v1701, %v1709
        %v1712 = vmul.f32 %v1710, %v1710
        %v1713 = vmul.f32 %v1711, %v1711
        %1714 = vadd.xlane.f32.xlu0 %v1712
        %v1715 = vpop.xlane.xlu0 %1714
        %1716 = vadd.xlane.f32.xlu0 %v1713
        %v1717 = vpop.xlane.xlu0 %1716
        %v1718 = vmul.f32 %v1715, %v1324
        %v1719 = vmul.f32 %v1717, %v1324
        %v1720 = vadd.f32 %v1718, 1e-12
        %v1721 = vadd.f32 %v1719, 1e-12
        %v1722 = vrsqrt.pop %v1720
        %v1723 = vmul.f32 %v1722, %v1720
        %v1724 = vmul.f32 %v1723, %v1722
        %v1725 = vmul.f32 0.5, %v1724
        %v1726 = vsub.f32 1.5, %v1725
        %v1727 = vmul.f32 %v1722, %v1726
        %vm1728 = vweird.f32 %v1720
        %vm1729 = vweird.f32 %v1722
        %vm1730 = vmor %vm1728, %vm1729
        %v1731 = vsel %vm1730, %v1722, %v1727
        %v1732 = vrsqrt.pop %v1721
        %v1733 = vmul.f32 %v1732, %v1721
        %v1734 = vmul.f32 %v1733, %v1732
        %v1735 = vmul.f32 0.5, %v1734
        %v1736 = vsub.f32 1.5, %v1735
        %v1737 = vmul.f32 %v1732, %v1736
        %vm1738 = vweird.f32 %v1721
        %vm1739 = vweird.f32 %v1732
        %vm1740 = vmor %vm1738, %vm1739
        %v1741 = vsel %vm1740, %v1732, %v1737
        %v1742 = vmul.f32 %v1710, %v1731
        %v1743 = vmul.f32 %v1711, %v1741
        %v1745 = vperm.slane %v1702, 0
        %v1747 = vmul.f32 %v1742, %v1745
        %v1748 = vmul.f32 %v1743, %v1745
        %v1750 = vperm.slane %v1703, 0
        %v1752 = vadd.f32 %v1747, %v1750
        %v1753 = vadd.f32 %v1748, %v1750
        %1754 = vst [vmem:[#allocation2] sm:$0xff] %v1752
        %1755 = vst [vmem:[#allocation2 + $0x8] sm:$0xff] %v1753
        %p1756 = scmp.eq.s32.totalorder %s36, 1
        // Predicated region
        $region105: #{distilbert_transfer_forward.1} parent=91 // pred_check
          %p1757 = pneg %p1756
        $region106: #{distilbert_transfer_forward.1} parent=91 // pred_check_branch
          %1759 = sbr.rel (%p1757) target = $region108
        $region107: #{distilbert_transfer_forward.1} parent=91 // pred_region
          %v1760 = vrot.slane %v1752, 4
          %v1761 = vadd.f32 %v1752, %v1760
          %v1762 = vrot.slane %v1761, 2
          %v1763 = vadd.f32 %v1761, %v1762
          %v1764 = vrot.slane %v1763, 1
          %v1765 = vadd.f32 %v1763, %v1764
          %v1766 = vrot.slane %v1753, 4
          %v1767 = vadd.f32 %v1753, %v1766
          %v1768 = vrot.slane %v1767, 2
          %v1769 = vadd.f32 %v1767, %v1768
          %v1770 = vrot.slane %v1769, 1
          %v1771 = vadd.f32 %v1769, %v1770
          %v1772 = vrcp.pop 8.0
          %v1773 = vmul.f32 8.0, %v1772
          %v1774 = vsub.f32 1.0, %v1773
          %v1775 = vmul.f32 %v1772, %v1774
          %v1776 = vadd.f32 %v1772, %v1775
          %vm1777 = vweird.f32 %v1772
          %v1778 = vsel %vm1777, %v1772, %v1776
          %v1779 = vmul.f32 %v1765, %v1778
          %v1780 = vmul.f32 %v1771, %v1778
          %v1781 = vld [vmem:[%s16] sm:$0xf]
          %v1782 = vld [vmem:[%s16 + $0x4] sm:$0xf]
          %v1783 = vld [vmem:[%s16 + $0x8] sm:$0xf]
          %v1784 = vld [vmem:[%s16 + $0xc] sm:$0xf]
          %v1785 = vld [vmem:[%s16 + $0x10] sm:$0xf]
          %v1786 = vld [vmem:[%s16 + $0x14] sm:$0xf]
          %v1787 = vld [vmem:[%s16 + $0x18] sm:$0xf]
          %v1788 = vld [vmem:[%s16 + $0x1c] sm:$0xf]
          %v1789 = vld [vmem:[%s16 + $0x20] sm:$0xf]
          %v1790 = vld [vmem:[%s16 + $0x24] sm:$0xf]
          %v1791 = vld [vmem:[%s16 + $0x28] sm:$0xf]
          %v1792 = vld [vmem:[%s16 + $0x2c] sm:$0xf]
          %v1793 = vld [vmem:[%s16 + $0x30] sm:$0xf]
          %v1794 = vld [vmem:[%s16 + $0x34] sm:$0xf]
          %v1795 = vld [vmem:[%s16 + $0x38] sm:$0xf]
          %v1796 = vld [vmem:[%s16 + $0x3c] sm:$0xf]
          %v1797 = vpack.c.bf16 %v1779, %v1779
          %v1798 = vpack.c.bf16 %v1780, %v1780
          %v1799 = vld [vmem:[%s17] sm:$0x1]
          %v1801 = vperm.slane %v1799, 0
          %v1805 = vunpack.c.l.b16 %v1797
          %v1806 = vunpack.c.l.b16 %v1798
          %vm1807 = vcmask 1041409
          %v1808 = vsel %vm1807, %v1806, %v1805
          %v1809 = vpack.c.b16 %v1808, %v1808
          %v1827 = vunpack.c.l.b16 %v1781
          %v1828 = vunpack.c.l.b16 %v1782
          %v1829 = vunpack.c.l.b16 %v1783
          %v1830 = vunpack.c.l.b16 %v1784
          %v1831 = vunpack.c.l.b16 %v1785
          %v1832 = vunpack.c.l.b16 %v1786
          %v1833 = vunpack.c.l.b16 %v1787
          %v1834 = vunpack.c.l.b16 %v1788
          %v1835 = vunpack.c.l.b16 %v1789
          %v1836 = vunpack.c.l.b16 %v1790
          %v1837 = vunpack.c.l.b16 %v1791
          %v1838 = vunpack.c.l.b16 %v1792
          %v1839 = vunpack.c.l.b16 %v1793
          %v1840 = vunpack.c.l.b16 %v1794
          %v1841 = vunpack.c.l.b16 %v1795
          %v1842 = vunpack.c.l.b16 %v1796
          %v1843 = vpack.c.b16 %v1828, %v1827
          %v1844 = vpack.c.b16 %v1830, %v1829
          %v1845 = vpack.c.b16 %v1832, %v1831
          %v1846 = vpack.c.b16 %v1834, %v1833
          %v1847 = vpack.c.b16 %v1836, %v1835
          %v1848 = vpack.c.b16 %v1838, %v1837
          %v1849 = vpack.c.b16 %v1840, %v1839
          %v1850 = vpack.c.b16 %v1842, %v1841
          %1859 = vmatpush.bf16.msra.mxu0 %v1850
          %1860 = vmatpush.bf16.msra.mxu0 %v1849
          %1861 = vmatpush.bf16.msra.mxu0 %v1848
          %1862 = vmatpush.bf16.msra.mxu0 %v1847
          %1863 = vmatpush.bf16.msra.mxu0 %v1846
          %1864 = vmatpush.bf16.msra.mxu0 %v1845
          %1865 = vmatpush.bf16.msra.mxu0 %v1844
          %1866 = vmatpush.bf16.msra.mxu0 %v1843
          %1867 = vmatmul.bf16.gmra.mxu0 %v1809
          %v1868 = vpop.f32.mrf.mxu0
          %v1869 = vadd.f32 %v1801, %v1868
          %v1870 = vpop.f32.mrf.mxu0
          %1871 = vdwg.mxu0
          %1872 = vst [vmem:[#allocation9] sm:$0x3] %v1869
        $region108: #{distilbert_transfer_forward.1} parent=91 // pred_fallthru
          _
        // Predicated region
        $region109: #{distilbert_transfer_forward.1} parent=91 // pred_check
          %p1873 = pneg %p487
        $region110: #{distilbert_transfer_forward.1} parent=91 // pred_check_branch
          %1875 = sbr.rel (%p1873) target = $region112
        $region111: #{distilbert_transfer_forward.1} parent=91 // pred_region
          %1877 = vsyncadd [#allocation6], 0
          %s1879 = sshll.u32 [#allocation9], 4
          %s1880 = int_to_ptr.vmem [resolvable:$true] %s1879
          %s1881 = sshll.u32 %s18, 4
          %s1882 = int_to_ptr.hbm [resolvable:$true] %s1881
          %1884 = dma.vmem_to_hbm [thread:$0]  %s1880, 32, %s1882, [#allocation6]
        $region112: #{distilbert_transfer_forward.1} parent=91 // pred_fallthru
          _
        // Predicated region
        $region113: #{distilbert_transfer_forward.1} parent=91 // pred_check
          %p1885 = pneg %p487
        $region114: #{distilbert_transfer_forward.1} parent=91 // pred_check_branch
          %1887 = sbr.rel (%p1885) target = $region116
        $region115: #{distilbert_transfer_forward.1} parent=91 // pred_region
          %1889 = dma.done [#allocation6], 32
        $region116: #{distilbert_transfer_forward.1} parent=91 // pred_fallthru
          _
      $region92: #{distilbert_transfer_forward.1} parent=5 // pred_fallthru
        _
      %p1890 = scmp.le.s32.totalorder 2, %s31
      // Predicated region
      $region117: #{distilbert_transfer_forward.1} parent=5 // pred_check
        %p1891 = pneg %p1890
      $region118: #{distilbert_transfer_forward.1} parent=5 // pred_check_branch
        %1893 = sbr.rel (%p1891) target = $region120
      $region119: #{distilbert_transfer_forward.1} parent=5 // pred_region
        %s1894 = ssub.s32 %s31, 2
      $region120: #{distilbert_transfer_forward.1} parent=5 // pred_fallthru
        _
    $region6: #{distilbert_transfer_forward.1} parent=1 // loop_footer
      %s35 = sadd.s32 1, %s31
    $region7: #{distilbert_transfer_forward.1} parent=1 // loop_footer_branch
      %30 = sbr.rel target = $region3
    $region8: #{distilbert_transfer_forward.1} parent=1 // loop_exit
      _
    %1895 = vsyncpa [#allocation5], 1
    %s1896 = scalar_lea.sflag [#allocation5], 1
    %1897 = vsyncpa %s1896, 1
    %1898 = vsyncpa [#allocation8], 1
    %s1899 = scalar_lea.sflag [#allocation8], 1
    %1900 = vsyncpa %s1899, 1
    %1901 = vsyncpa [#allocation6], 1
    %s1902 = scalar_lea.sflag [#allocation6], 1
    %1903 = vsyncpa %s1902, 1

</llo_original>
